<compile_context>
chip_gen: v5e
topology: v5e:2x2
jax: 0.10.0
libtpu: 0.0.40
codegen_flags: <defaults>
</compile_context>

<pallas_src>
import jax
import jax.numpy as jnp
from jax import lax
from jax.experimental import pallas as pl
from jax.experimental.pallas import tpu as pltpu

_GROUP = 8  # timesteps per scan group == one full sublane tile per store


def _rwkv_chunk_kernel(x_ref, mv_ref, omv_ref, mr_ref, omr_ref, decay_ref,
                       wv_ref, wr_ref, wo_ref, o_ref,
                       state_ref, zv_ref, zr_ref):
    """One (block_b, block_t) chunk of the RWKV block.

    x_ref       : (Bt, Tc, H) input chunk (caller dtype)
    m*/om*      : (1, 1, H)   time-mix coefficients and complements (f32)
    decay_ref   : (1, H)      exp(-exp(time_decay)) (f32)
    w*_ref      : (H, H)      value / receptance / output weights,
                              pre-transposed so the kernel does z @ W^T
    o_ref       : (Bt, Tc, H) output chunk (caller dtype)
    state_ref   : (Bt, H)     carried recurrent state (f32, persists across
                              the sequential time-chunk grid axis)
    zv/zr_ref   : (Bt, Tc, H) scratch slabs of mixed matmul inputs (matmul
                              dtype), filled group-by-group in phase 1.
    """
    c = pl.program_id(1)  # time-chunk index (sequential / "arbitrary")

    @pl.when(c == 0)
    def _():
        state_ref[...] = jnp.zeros_like(state_ref)

    bt, tc, h = x_ref.shape
    f32 = jnp.float32
    md = zv_ref.dtype

    decay = decay_ref[...]                   # (1, H) -> broadcasts over (Bt, H)
    mv, omv = mv_ref[...], omv_ref[...]      # (1, 1, H)
    mr, omr = mr_ref[...], omr_ref[...]

    # ---- Phase 1: first-order linear scan, 8 timesteps per group (VPU). ----
    # Only 8 live (Bt, H) state rows at any time; each group emits one full
    # sublane-tile store into the zv / zr scratch slabs (no masked stores,
    # no vreg spills at large block_t).
    def scan_group(base, glen, st):
        xg = x_ref[:, pl.ds(base, glen), :].astype(f32)   # (Bt, glen, H)
        rows = []
        for i in range(glen):                              # static unroll of 8
            rows.append(st)
            st = xg[:, i, :] + st * decay
        sg = jnp.stack(rows, axis=1)                       # (Bt, glen, H)
        zv_ref[:, pl.ds(base, glen), :] = (xg * mv + sg * omv).astype(md)
        zr_ref[:, pl.ds(base, glen), :] = (xg * mr + sg * omr).astype(md)
        return st

    n_full = tc // _GROUP

    def group_body(g, st):
        return scan_group(pl.multiple_of(g * _GROUP, _GROUP), _GROUP, st)

    st = state_ref[...]
    if n_full > 0:
        st = lax.fori_loop(0, n_full, group_body, st)
    rem = tc - n_full * _GROUP
    if rem:  # tail only when block_t == T and T % 8 != 0
        st = scan_group(n_full * _GROUP, rem, st)
    state_ref[...] = st                     # carry across time chunks

    # NOTE: k = key(zk) in the reference module never reaches the output, so
    # neither zk nor the key weight is computed / loaded (dead code).
    # TODO(synk): optional log2(Tc) doubling scan (pltpu.roll over the time /
    # sublane axis) would remove the serial FMA chain if phase 1 ever binds.

    # ---- Phase 2: chunk-batched projections, M = Bt*Tc rows (MXU). ---------
    m = bt * tc
    zv2 = zv_ref[...].reshape(m, h)
    zr2 = zr_ref[...].reshape(m, h)
    v = jnp.dot(zv2, wv_ref[...], preferred_element_type=f32)
    r = jax.nn.sigmoid(
        jnp.dot(zr2, wr_ref[...], preferred_element_type=f32))
    out = r * jnp.dot(v.astype(md), wo_ref[...], preferred_element_type=f32)
    o_ref[...] = out.reshape(bt, tc, h).astype(o_ref.dtype)


def _vmem_bytes_estimate(block_b, block_t, H, io_itemsize, w_itemsize,
                         md_itemsize, weight_bufs):
    """Rough per-core VMEM footprint for one (block_b, block_t) tile choice."""
    blk = block_b * block_t * H
    return (weight_bufs * 3 * H * H * w_itemsize   # resident weight blocks
            + 2 * 2 * blk * io_itemsize            # x + out blocks, 2-deep pipe
            + 2 * blk * md_itemsize                # zv / zr scratch slabs
            + 5 * blk * 4                          # phase-2 live f32 temps
            + block_b * H * 4                      # carried state
            + (2 << 20))                           # small vectors + headroom


def _vmem_capacity_bytes():
    try:
        return int(pltpu.get_tpu_info().vmem_capacity_bytes)
    except Exception:
        return 64 << 20   # v7x per-TensorCore size = safe lower bound


def rwkv_block_forward(x, params, *, block_t=None, block_b=None,
                       matmul_dtype=jnp.float32):
    """RWKV_Block.forward (zero initial state).  x: (B, T, H) -> (B, T, H).

    x and the output keep the caller's dtype; mix / scan math runs in f32
    inside the kernel; matmuls take `matmul_dtype` inputs with f32 accumulate.
    """
    B, T, H = x.shape
    out_dtype = x.dtype
    io_itemsize = jnp.dtype(out_dtype).itemsize
    md_itemsize = jnp.dtype(matmul_dtype).itemsize

    vmem_budget = int(0.85 * _vmem_capacity_bytes())

    if block_b is None:
        if B == 1:
            block_b = 1
        else:
            # Largest proper divisor -> >= 2 batch tiles, so the "parallel"
            # grid axis can shard across v7x's two TensorCores.
            block_b = max(d for d in range(1, B) if B % d == 0)
    assert B % block_b == 0, "block_b must divide B"

    if block_t is None:
        block_t = T
        for cand in (512, 256, 128, 64, 32, 16, 8):
            if T % cand == 0 and _vmem_bytes_estimate(
                    block_b, cand, H, io_itemsize, md_itemsize,
                    md_itemsize, weight_bufs=1) <= vmem_budget:
                block_t = cand
                break
    assert T % block_t == 0, "block_t must divide T"
    assert block_t == T or block_t % 8 == 0, \
        "block_t must be a multiple of 8 (or the full sequence length)"

    f32 = jnp.float32
    decay = jnp.exp(-jnp.exp(params["time_decay"].astype(f32))).reshape(1, H)
    mv = params["time_mix_v"].astype(f32).reshape(1, 1, H)
    mr = params["time_mix_r"].astype(f32).reshape(1, 1, H)
    omv = 1.0 - mv
    omr = 1.0 - mr
    # Pre-transpose Linear weights so the kernel does z @ W^T directly; bf16
    # weights halve HBM/VMEM weight bytes with f32 accumulation in the kernel.
    wv_t = params["value_w"].T.astype(matmul_dtype)
    wr_t = params["receptance_w"].T.astype(matmul_dtype)
    wo_t = params["output_w"].T.astype(matmul_dtype)

    xo_spec = pl.BlockSpec((block_b, block_t, H), lambda b, c: (b, c, 0))
    vec3 = pl.BlockSpec((1, 1, H), lambda b, c: (0, 0, 0))
    vec2 = pl.BlockSpec((1, H), lambda b, c: (0, 0))

    est = _vmem_bytes_estimate(block_b, block_t, H, io_itemsize, md_itemsize,
                               md_itemsize, weight_bufs=1)
    # Never request more than the chip actually has (v7x = 64 MiB per core).
    vmem_limit = None if est <= (16 << 20) else min(est, vmem_budget)

    def build(weight_pipeline_mode):
        wkw = ({} if weight_pipeline_mode is None
               else {"pipeline_mode": weight_pipeline_mode})
        # Grid-invariant weights: constant block index, so single buffering is
        # enough and saves 3*H*H*itemsize of VMEM.
        # TODO(synk): at large H where 3*H*H*itemsize approaches the VMEM
        # budget (e.g. H >= 4096 bf16 on v7x), keep the weights in HBM
        # (memory_space=pl.ANY) and N-tile the projections with a nested
        # pltpu.emit_pipeline instead of holding full (H, H) blocks resident.
        wmat = pl.BlockSpec((H, H), lambda b, c: (0, 0), **wkw)
        return pl.pallas_call(
            _rwkv_chunk_kernel,
            out_shape=jax.ShapeDtypeStruct((B, T, H), out_dtype),
            grid_spec=pltpu.PrefetchScalarGridSpec(
                num_scalar_prefetch=0,
                grid=(B // block_b, T // block_t),
                in_specs=[xo_spec,            # x
                          vec3, vec3,         # time_mix_v, 1 - time_mix_v
                          vec3, vec3,         # time_mix_r, 1 - time_mix_r
                          vec2,               # exp(-exp(time_decay))
                          wmat, wmat, wmat],  # value / receptance / output W^T
                out_specs=xo_spec,
                scratch_shapes=[
                    pltpu.VMEM((block_b, H), jnp.float32),            # state
                    pltpu.VMEM((block_b, block_t, H), matmul_dtype),  # zv slab
                    pltpu.VMEM((block_b, block_t, H), matmul_dtype),  # zr slab
                ],
            ),
            compiler_params=pltpu.CompilerParams(
                # batch tiles independent -> "parallel" (v7x 2-TC sharding);
                # time chunks carry state in scratch -> must stay "arbitrary".
                dimension_semantics=("parallel", "arbitrary"),
                vmem_limit_bytes=vmem_limit),
        )

    args = (x, mv, omv, mr, omr, decay, wv_t, wr_t, wo_t)
    try:
        return build(pl.Buffered(1))(*args)
    except Exception:
        # Fall back to default (double-buffered) weight pipelining if this
        # jax build rejects pipeline_mode / Buffered(1).
        return build(None)(*args)


def _reference_forward(x, params):
    """Pure-JAX reference implementing the PyTorch forward exactly."""
    B, T, H = x.shape
    decay = jnp.exp(-jnp.exp(params["time_decay"]))
    mv, mr = params["time_mix_v"], params["time_mix_r"]
    wv, wr, wo = params["value_w"], params["receptance_w"], params["output_w"]

    def step(state, xt):
        v = (xt * mv + state * (1.0 - mv)) @ wv.T
        r = jax.nn.sigmoid((xt * mr + state * (1.0 - mr)) @ wr.T)
        new_state = xt + state * decay
        return new_state, r * (v @ wo.T)

    state0 = jnp.zeros((B, H), jnp.float32)
    _, outs = jax.lax.scan(step, state0, jnp.transpose(x, (1, 0, 2)))
    return jnp.transpose(outs, (1, 0, 2))


def _init_params(key, hidden_dim):
    k0, k1, k2, k3 = jax.random.split(key, 4)
    bound = 1.0 / (hidden_dim ** 0.5)
    uni = lambda k: jax.random.uniform(
        k, (hidden_dim, hidden_dim), jnp.float32, -bound, bound)
    return {
        "time_decay": jax.random.normal(k0, (hidden_dim,), jnp.float32) * 0.01,
        "time_mix_v": jnp.full((hidden_dim,), 0.5, jnp.float32),
        "time_mix_r": jnp.full((hidden_dim,), 0.5, jnp.float32),
        "value_w": uni(k1),          # (out, in), like torch.nn.Linear
        "receptance_w": uni(k2),
        "output_w": uni(k3),
    }


if __name__ == "__main__":
    B, T, H = 2, 16, 32
    key = jax.random.PRNGKey(0)
    kx, kp = jax.random.split(key)
    x = jax.random.normal(kx, (B, T, H), jnp.float32)
    params = _init_params(kp, H)

    ref = _reference_forward(x, params)

    # f32 path, 2 time chunks x 2 batch tiles: exercises the carried state and
    # the parallel batch axis; must match the pure-JAX reference tightly.
    out = jax.block_until_ready(rwkv_block_forward(x, params, block_t=8))
    assert out.shape == (B, T, H) and out.dtype == x.dtype
    assert jnp.allclose(out, ref, atol=1e-5, rtol=1e-5), "f32 kernel mismatch"

    # bf16 streaming + bf16 MXU weights (v6e/v7x-friendly): x / out stay bf16
    # end to end (no wrapper upcast); looser tolerance.
    x_bf16 = x.astype(jnp.bfloat16)
    out_bf16 = jax.block_until_ready(
        rwkv_block_forward(x_bf16, params, block_t=8,
                           matmul_dtype=jnp.bfloat16))
    assert out_bf16.shape == (B, T, H) and out_bf16.dtype == jnp.bfloat16
    assert float(jnp.max(jnp.abs(out_bf16.astype(jnp.float32) - ref))) < 1e-1, \
        "bf16 kernel mismatch"

    print("KERNEL_OK")
</pallas_src>

<mosaic_0001>
module attributes {stable_mosaic.version = 11 : i64} {
  func.func @_rwkv_chunk_kernel(%arg0: i32, %arg1: i32, %arg2: memref<1x8x32xf32, #tpu.memory_space<vmem>>, %arg3: memref<1x1x32xf32, #tpu.memory_space<vmem>>, %arg4: memref<1x1x32xf32, #tpu.memory_space<vmem>>, %arg5: memref<1x1x32xf32, #tpu.memory_space<vmem>>, %arg6: memref<1x1x32xf32, #tpu.memory_space<vmem>>, %arg7: memref<1x32xf32, #tpu.memory_space<vmem>>, %arg8: memref<32x32xf32, #tpu.memory_space<vmem>>, %arg9: memref<32x32xf32, #tpu.memory_space<vmem>>, %arg10: memref<32x32xf32, #tpu.memory_space<vmem>>, %arg11: memref<1x8x32xf32, #tpu.memory_space<vmem>>, %arg12: memref<1x32xf32, #tpu.memory_space<vmem>>, %arg13: memref<1x8x32xf32, #tpu.memory_space<vmem>>, %arg14: memref<1x8x32xf32, #tpu.memory_space<vmem>>) attributes {dimension_semantics = [#tpu.dimension_semantics<parallel>, #tpu.dimension_semantics<arbitrary>], iteration_bounds = array<i64: 2, 2>, scalar_prefetch = 0 : i64, scratch_operands = 3 : i64, tpu.core_type = #tpu.core_type<tc>, window_params = [{transform_indices = @transform_0, window_bounds = array<i64: 1, 8, 32>}, {pipeline_mode = #tpu.pipeline_mode<synchronous>, transform_indices = @transform_1, window_bounds = array<i64: 1, 1, 32>}, {pipeline_mode = #tpu.pipeline_mode<synchronous>, transform_indices = @transform_2, window_bounds = array<i64: 1, 1, 32>}, {pipeline_mode = #tpu.pipeline_mode<synchronous>, transform_indices = @transform_3, window_bounds = array<i64: 1, 1, 32>}, {pipeline_mode = #tpu.pipeline_mode<synchronous>, transform_indices = @transform_4, window_bounds = array<i64: 1, 1, 32>}, {pipeline_mode = #tpu.pipeline_mode<synchronous>, transform_indices = @transform_5, window_bounds = array<i64: 1, 32>}, {pipeline_mode = #tpu.pipeline_mode<synchronous>, transform_indices = @transform_6, window_bounds = array<i64: 32, 32>}, {pipeline_mode = #tpu.pipeline_mode<synchronous>, transform_indices = @transform_7, window_bounds = array<i64: 32, 32>}, {pipeline_mode = #tpu.pipeline_mode<synchronous>, transform_indices = @transform_8, window_bounds = array<i64: 32, 32>}, {transform_indices = @transform_9, window_bounds = array<i64: 1, 8, 32>}]} {
    %c0_i32 = arith.constant 0 : i32
    %0 = arith.cmpi eq, %arg1, %c0_i32 : i32
    %1 = arith.extui %0 : i1 to i32
    %c0_i32_0 = arith.constant 0 : i32
    %2 = arith.cmpi ne, %1, %c0_i32_0 : i32
    scf.if %2 {
      %cst_43 = arith.constant 0.000000e+00 : f32
      %87 = vector.broadcast %cst_43 : f32 to vector<1x32xf32>
      %c0_44 = arith.constant 0 : index
      %c0_45 = arith.constant 0 : index
      %88 = vector.load %arg12[%c0_44, %c0_45] : memref<1x32xf32, #tpu.memory_space<vmem>>, vector<1x32xf32>
      tpu.vector_store %arg12[%c0_44, %c0_45], %87 {strides = array<i32>} : memref<1x32xf32, #tpu.memory_space<vmem>>, vector<1x32xf32>,
    } else {
    }
    %c0 = arith.constant 0 : index
    %c0_1 = arith.constant 0 : index
    %3 = vector.load %arg7[%c0, %c0_1] : memref<1x32xf32, #tpu.memory_space<vmem>>, vector<1x32xf32>
    %c0_2 = arith.constant 0 : index
    %c0_3 = arith.constant 0 : index
    %c0_4 = arith.constant 0 : index
    %4 = vector.load %arg3[%c0_2, %c0_3, %c0_4] : memref<1x1x32xf32, #tpu.memory_space<vmem>>, vector<1x1x32xf32>
    %c0_5 = arith.constant 0 : index
    %c0_6 = arith.constant 0 : index
    %c0_7 = arith.constant 0 : index
    %5 = vector.load %arg4[%c0_5, %c0_6, %c0_7] : memref<1x1x32xf32, #tpu.memory_space<vmem>>, vector<1x1x32xf32>
    %c0_8 = arith.constant 0 : index
    %c0_9 = arith.constant 0 : index
    %c0_10 = arith.constant 0 : index
    %6 = vector.load %arg5[%c0_8, %c0_9, %c0_10] : memref<1x1x32xf32, #tpu.memory_space<vmem>>, vector<1x1x32xf32>
    %c0_11 = arith.constant 0 : index
    %c0_12 = arith.constant 0 : index
    %c0_13 = arith.constant 0 : index
    %7 = vector.load %arg6[%c0_11, %c0_12, %c0_13] : memref<1x1x32xf32, #tpu.memory_space<vmem>>, vector<1x1x32xf32>
    %c0_14 = arith.constant 0 : index
    %c0_15 = arith.constant 0 : index
    %8 = vector.load %arg12[%c0_14, %c0_15] : memref<1x32xf32, #tpu.memory_space<vmem>>, vector<1x32xf32>
    %c0_i32_16 = arith.constant 0 : i32
    %c8_i32 = arith.constant 8 : i32
    %9 = arith.muli %c0_i32_16, %c8_i32 : i32
    %10 = tpu.assume_multiple %9, 8 : i32
    %c0_17 = arith.constant 0 : index
    %11 = arith.index_cast %10 : i32 to index
    %c0_18 = arith.constant 0 : index
    %12 = vector.load %arg2[%c0_17, %11, %c0_18] : memref<1x8x32xf32, #tpu.memory_space<vmem>>, vector<1x8x32xf32>
    %13 = vector.extract_strided_slice %12 {offsets = [0, 0, 0], sizes = [1, 1, 32], strides = [1, 1, 1]} : vector<1x8x32xf32> to vector<1x1x32xf32>
    %14 = vector.shape_cast %13 : vector<1x1x32xf32> to vector<1x32xf32>
    %15 = arith.mulf %8, %3 : vector<1x32xf32>
    %16 = arith.addf %14, %15 : vector<1x32xf32>
    %17 = vector.extract_strided_slice %12 {offsets = [0, 1, 0], sizes = [1, 1, 32], strides = [1, 1, 1]} : vector<1x8x32xf32> to vector<1x1x32xf32>
    %18 = vector.shape_cast %17 : vector<1x1x32xf32> to vector<1x32xf32>
    %19 = arith.mulf %16, %3 : vector<1x32xf32>
    %20 = arith.addf %18, %19 : vector<1x32xf32>
    %21 = vector.extract_strided_slice %12 {offsets = [0, 2, 0], sizes = [1, 1, 32], strides = [1, 1, 1]} : vector<1x8x32xf32> to vector<1x1x32xf32>
    %22 = vector.shape_cast %21 : vector<1x1x32xf32> to vector<1x32xf32>
    %23 = arith.mulf %20, %3 : vector<1x32xf32>
    %24 = arith.addf %22, %23 : vector<1x32xf32>
    %25 = vector.extract_strided_slice %12 {offsets = [0, 3, 0], sizes = [1, 1, 32], strides = [1, 1, 1]} : vector<1x8x32xf32> to vector<1x1x32xf32>
    %26 = vector.shape_cast %25 : vector<1x1x32xf32> to vector<1x32xf32>
    %27 = arith.mulf %24, %3 : vector<1x32xf32>
    %28 = arith.addf %26, %27 : vector<1x32xf32>
    %29 = vector.extract_strided_slice %12 {offsets = [0, 4, 0], sizes = [1, 1, 32], strides = [1, 1, 1]} : vector<1x8x32xf32> to vector<1x1x32xf32>
    %30 = vector.shape_cast %29 : vector<1x1x32xf32> to vector<1x32xf32>
    %31 = arith.mulf %28, %3 : vector<1x32xf32>
    %32 = arith.addf %30, %31 : vector<1x32xf32>
    %33 = vector.extract_strided_slice %12 {offsets = [0, 5, 0], sizes = [1, 1, 32], strides = [1, 1, 1]} : vector<1x8x32xf32> to vector<1x1x32xf32>
    %34 = vector.shape_cast %33 : vector<1x1x32xf32> to vector<1x32xf32>
    %35 = arith.mulf %32, %3 : vector<1x32xf32>
    %36 = arith.addf %34, %35 : vector<1x32xf32>
    %37 = vector.extract_strided_slice %12 {offsets = [0, 6, 0], sizes = [1, 1, 32], strides = [1, 1, 1]} : vector<1x8x32xf32> to vector<1x1x32xf32>
    %38 = vector.shape_cast %37 : vector<1x1x32xf32> to vector<1x32xf32>
    %39 = arith.mulf %36, %3 : vector<1x32xf32>
    %40 = arith.addf %38, %39 : vector<1x32xf32>
    %41 = vector.extract_strided_slice %12 {offsets = [0, 7, 0], sizes = [1, 1, 32], strides = [1, 1, 1]} : vector<1x8x32xf32> to vector<1x1x32xf32>
    %42 = vector.shape_cast %41 : vector<1x1x32xf32> to vector<1x32xf32>
    %43 = arith.mulf %40, %3 : vector<1x32xf32>
    %44 = arith.addf %42, %43 : vector<1x32xf32>
    %45 = vector.shape_cast %8 : vector<1x32xf32> to vector<1x1x32xf32>
    %46 = vector.shape_cast %16 : vector<1x32xf32> to vector<1x1x32xf32>
    %47 = vector.shape_cast %20 : vector<1x32xf32> to vector<1x1x32xf32>
    %48 = vector.shape_cast %24 : vector<1x32xf32> to vector<1x1x32xf32>
    %49 = vector.shape_cast %28 : vector<1x32xf32> to vector<1x1x32xf32>
    %50 = vector.shape_cast %32 : vector<1x32xf32> to vector<1x1x32xf32>
    %51 = vector.shape_cast %36 : vector<1x32xf32> to vector<1x1x32xf32>
    %52 = vector.shape_cast %40 : vector<1x32xf32> to vector<1x1x32xf32>
    %53 = tpu.concatenate %45, %46, %47, %48, %49, %50, %51, %52 in 1 : vector<1x1x32xf32>, vector<1x1x32xf32>, vector<1x1x32xf32>, vector<1x1x32xf32>, vector<1x1x32xf32>, vector<1x1x32xf32>, vector<1x1x32xf32>, vector<1x1x32xf32> -> vector<1x8x32xf32>
    %54 = vector.broadcast %4 : vector<1x1x32xf32> to vector<1x8x32xf32>
    %55 = arith.mulf %12, %54 : vector<1x8x32xf32>
    %56 = vector.broadcast %5 : vector<1x1x32xf32> to vector<1x8x32xf32>
    %57 = arith.mulf %53, %56 : vector<1x8x32xf32>
    %58 = arith.addf %55, %57 : vector<1x8x32xf32>
    %c0_19 = arith.constant 0 : index
    %59 = arith.index_cast %10 : i32 to index
    %c0_20 = arith.constant 0 : index
    %60 = vector.load %arg13[%c0_19, %59, %c0_20] : memref<1x8x32xf32, #tpu.memory_space<vmem>>, vector<1x8x32xf32>
    tpu.vector_store %arg13[%c0_19, %59, %c0_20], %58 {strides = array<i32>} : memref<1x8x32xf32, #tpu.memory_space<vmem>>, vector<1x8x32xf32>,
    %61 = vector.broadcast %6 : vector<1x1x32xf32> to vector<1x8x32xf32>
    %62 = arith.mulf %12, %61 : vector<1x8x32xf32>
    %63 = vector.broadcast %7 : vector<1x1x32xf32> to vector<1x8x32xf32>
    %64 = arith.mulf %53, %63 : vector<1x8x32xf32>
    %65 = arith.addf %62, %64 : vector<1x8x32xf32>
    %c0_21 = arith.constant 0 : index
    %66 = arith.index_cast %10 : i32 to index
    %c0_22 = arith.constant 0 : index
    %67 = vector.load %arg14[%c0_21, %66, %c0_22] : memref<1x8x32xf32, #tpu.memory_space<vmem>>, vector<1x8x32xf32>
    tpu.vector_store %arg14[%c0_21, %66, %c0_22], %65 {strides = array<i32>} : memref<1x8x32xf32, #tpu.memory_space<vmem>>, vector<1x8x32xf32>,
    %c1_i32 = arith.constant 1 : i32
    %c0_23 = arith.constant 0 : index
    %c0_24 = arith.constant 0 : index
    %68 = vector.load %arg12[%c0_23, %c0_24] : memref<1x32xf32, #tpu.memory_space<vmem>>, vector<1x32xf32>
    tpu.vector_store %arg12[%c0_23, %c0_24], %44 {strides = array<i32>} : memref<1x32xf32, #tpu.memory_space<vmem>>, vector<1x32xf32>,
    %c0_25 = arith.constant 0 : index
    %c0_26 = arith.constant 0 : index
    %c0_27 = arith.constant 0 : index
    %69 = vector.load %arg13[%c0_25, %c0_26, %c0_27] : memref<1x8x32xf32, #tpu.memory_space<vmem>>, vector<1x8x32xf32>
    %70 = vector.shape_cast %69 : vector<1x8x32xf32> to vector<8x32xf32>
    %c0_28 = arith.constant 0 : index
    %c0_29 = arith.constant 0 : index
    %c0_30 = arith.constant 0 : index
    %71 = vector.load %arg14[%c0_28, %c0_29, %c0_30] : memref<1x8x32xf32, #tpu.memory_space<vmem>>, vector<1x8x32xf32>
    %72 = vector.shape_cast %71 : vector<1x8x32xf32> to vector<8x32xf32>
    %c0_31 = arith.constant 0 : index
    %c0_32 = arith.constant 0 : index
    %73 = vector.load %arg8[%c0_31, %c0_32] : memref<32x32xf32, #tpu.memory_space<vmem>>, vector<32x32xf32>
    %cst = arith.constant dense<0.000000e+00> : vector<8x32xf32>
    %74 = tpu.matmul %70, %73, %cst {dimension_numbers = #tpu.dot_dimension_numbers<[1], [0], [0], [1], [0, 0, 1, 1], [], []>} : vector<8x32xf32>, vector<32x32xf32>, vector<8x32xf32> -> vector<8x32xf32>
    %c0_33 = arith.constant 0 : index
    %c0_34 = arith.constant 0 : index
    %75 = vector.load %arg9[%c0_33, %c0_34] : memref<32x32xf32, #tpu.memory_space<vmem>>, vector<32x32xf32>
    %cst_35 = arith.constant dense<0.000000e+00> : vector<8x32xf32>
    %76 = tpu.matmul %72, %75, %cst_35 {dimension_numbers = #tpu.dot_dimension_numbers<[1], [0], [0], [1], [0, 0, 1, 1], [], []>} : vector<8x32xf32>, vector<32x32xf32>, vector<8x32xf32> -> vector<8x32xf32>
    %77 = arith.negf %76 : vector<8x32xf32>
    %78 = math.exp %77 : vector<8x32xf32>
    %cst_36 = arith.constant 1.000000e+00 : f32
    %79 = vector.broadcast %cst_36 : f32 to vector<8x32xf32>
    %80 = arith.addf %79, %78 : vector<8x32xf32>
    %81 = arith.divf %79, %80 : vector<8x32xf32>
    %c0_37 = arith.constant 0 : index
    %c0_38 = arith.constant 0 : index
    %82 = vector.load %arg10[%c0_37, %c0_38] : memref<32x32xf32, #tpu.memory_space<vmem>>, vector<32x32xf32>
    %cst_39 = arith.constant dense<0.000000e+00> : vector<8x32xf32>
    %83 = tpu.matmul %74, %82, %cst_39 {dimension_numbers = #tpu.dot_dimension_numbers<[1], [0], [0], [1], [0, 0, 1, 1], [], []>} : vector<8x32xf32>, vector<32x32xf32>, vector<8x32xf32> -> vector<8x32xf32>
    %84 = arith.mulf %81, %83 : vector<8x32xf32>
    %85 = vector.shape_cast %84 : vector<8x32xf32> to vector<1x8x32xf32>
    %c0_40 = arith.constant 0 : index
    %c0_41 = arith.constant 0 : index
    %c0_42 = arith.constant 0 : index
    %86 = vector.load %arg11[%c0_40, %c0_41, %c0_42] : memref<1x8x32xf32, #tpu.memory_space<vmem>>, vector<1x8x32xf32>
    tpu.vector_store %arg11[%c0_40, %c0_41, %c0_42], %85 {strides = array<i32>} : memref<1x8x32xf32, #tpu.memory_space<vmem>>, vector<1x8x32xf32>,
    return
  }
  func.func @transform_0(%arg0: i32, %arg1: i32) -> (i32, i32, i32) {
    %c0_i32 = arith.constant 0 : i32
    %c0_i32_0 = arith.constant 0 : i32
    return %arg0, %arg1, %c0_i32 : i32, i32, i32
  }
  func.func @transform_1(%arg0: i32, %arg1: i32) -> (i32, i32, i32) {
    %c0_i32 = arith.constant 0 : i32
    %c0_i32_0 = arith.constant 0 : i32
    %c0_i32_1 = arith.constant 0 : i32
    %c0_i32_2 = arith.constant 0 : i32
    return %c0_i32, %c0_i32_0, %c0_i32_1 : i32, i32, i32
  }
  func.func @transform_2(%arg0: i32, %arg1: i32) -> (i32, i32, i32) {
    %c0_i32 = arith.constant 0 : i32
    %c0_i32_0 = arith.constant 0 : i32
    %c0_i32_1 = arith.constant 0 : i32
    %c0_i32_2 = arith.constant 0 : i32
    return %c0_i32, %c0_i32_0, %c0_i32_1 : i32, i32, i32
  }
  func.func @transform_3(%arg0: i32, %arg1: i32) -> (i32, i32, i32) {
    %c0_i32 = arith.constant 0 : i32
    %c0_i32_0 = arith.constant 0 : i32
    %c0_i32_1 = arith.constant 0 : i32
    %c0_i32_2 = arith.constant 0 : i32
    return %c0_i32, %c0_i32_0, %c0_i32_1 : i32, i32, i32
  }
  func.func @transform_4(%arg0: i32, %arg1: i32) -> (i32, i32, i32) {
    %c0_i32 = arith.constant 0 : i32
    %c0_i32_0 = arith.constant 0 : i32
    %c0_i32_1 = arith.constant 0 : i32
    %c0_i32_2 = arith.constant 0 : i32
    return %c0_i32, %c0_i32_0, %c0_i32_1 : i32, i32, i32
  }
  func.func @transform_5(%arg0: i32, %arg1: i32) -> (i32, i32) {
    %c0_i32 = arith.constant 0 : i32
    %c0_i32_0 = arith.constant 0 : i32
    %c0_i32_1 = arith.constant 0 : i32
    return %c0_i32, %c0_i32_0 : i32, i32
  }
  func.func @transform_6(%arg0: i32, %arg1: i32) -> (i32, i32) {
    %c0_i32 = arith.constant 0 : i32
    %c0_i32_0 = arith.constant 0 : i32
    %c0_i32_1 = arith.constant 0 : i32
    return %c0_i32, %c0_i32_0 : i32, i32
  }
  func.func @transform_7(%arg0: i32, %arg1: i32) -> (i32, i32) {
    %c0_i32 = arith.constant 0 : i32
    %c0_i32_0 = arith.constant 0 : i32
    %c0_i32_1 = arith.constant 0 : i32
    return %c0_i32, %c0_i32_0 : i32, i32
  }
  func.func @transform_8(%arg0: i32, %arg1: i32) -> (i32, i32) {
    %c0_i32 = arith.constant 0 : i32
    %c0_i32_0 = arith.constant 0 : i32
    %c0_i32_1 = arith.constant 0 : i32
    return %c0_i32, %c0_i32_0 : i32, i32
  }
  func.func @transform_9(%arg0: i32, %arg1: i32) -> (i32, i32, i32) {
    %c0_i32 = arith.constant 0 : i32
    %c0_i32_0 = arith.constant 0 : i32
    return %arg0, %arg1, %c0_i32 : i32, i32, i32
  }
}

module attributes {stable_mosaic.version = 11 : i64} {
  func.func @_rwkv_chunk_kernel(%arg0: i32, %arg1: i32, %arg2: memref<1x8x32xf32, #tpu.memory_space<vmem>>, %arg3: memref<1x1x32xf32, #tpu.memory_space<vmem>>, %arg4: memref<1x1x32xf32, #tpu.memory_space<vmem>>, %arg5: memref<1x1x32xf32, #tpu.memory_space<vmem>>, %arg6: memref<1x1x32xf32, #tpu.memory_space<vmem>>, %arg7: memref<1x32xf32, #tpu.memory_space<vmem>>, %arg8: memref<32x32xf32, #tpu.memory_space<vmem>>, %arg9: memref<32x32xf32, #tpu.memory_space<vmem>>, %arg10: memref<32x32xf32, #tpu.memory_space<vmem>>, %arg11: memref<1x8x32xf32, #tpu.memory_space<vmem>>, %arg12: memref<1x32xf32, #tpu.memory_space<vmem>>, %arg13: memref<1x8x32xf32, #tpu.memory_space<vmem>>, %arg14: memref<1x8x32xf32, #tpu.memory_space<vmem>>) attributes {dimension_semantics = [#tpu.dimension_semantics<parallel>, #tpu.dimension_semantics<arbitrary>], iteration_bounds = array<i64: 2, 2>, scalar_prefetch = 0 : i64, scratch_operands = 3 : i64, tpu.core_type = #tpu.core_type<tc>, window_params = [{transform_indices = @transform_0, window_bounds = array<i64: 1, 8, 32>}, {pipeline_mode = #tpu.pipeline_mode<synchronous>, transform_indices = @transform_1, window_bounds = array<i64: 1, 1, 32>}, {pipeline_mode = #tpu.pipeline_mode<synchronous>, transform_indices = @transform_2, window_bounds = array<i64: 1, 1, 32>}, {pipeline_mode = #tpu.pipeline_mode<synchronous>, transform_indices = @transform_3, window_bounds = array<i64: 1, 1, 32>}, {pipeline_mode = #tpu.pipeline_mode<synchronous>, transform_indices = @transform_4, window_bounds = array<i64: 1, 1, 32>}, {pipeline_mode = #tpu.pipeline_mode<synchronous>, transform_indices = @transform_5, window_bounds = array<i64: 1, 32>}, {pipeline_mode = #tpu.pipeline_mode<synchronous>, transform_indices = @transform_6, window_bounds = array<i64: 32, 32>}, {pipeline_mode = #tpu.pipeline_mode<synchronous>, transform_indices = @transform_7, window_bounds = array<i64: 32, 32>}, {pipeline_mode = #tpu.pipeline_mode<synchronous>, transform_indices = @transform_8, window_bounds = array<i64: 32, 32>}, {transform_indices = @transform_9, window_bounds = array<i64: 1, 8, 32>}]} {
    %c0_i32 = arith.constant 0 : i32
    %0 = arith.cmpi eq, %arg1, %c0_i32 : i32
    %1 = arith.extui %0 : i1 to i32
    %c0_i32_0 = arith.constant 0 : i32
    %2 = arith.cmpi ne, %1, %c0_i32_0 : i32
    scf.if %2 {
      %cst_43 = arith.constant 0.000000e+00 : f32
      %87 = vector.broadcast %cst_43 : f32 to vector<1x32xf32>
      %c0_44 = arith.constant 0 : index
      %c0_45 = arith.constant 0 : index
      %88 = vector.load %arg12[%c0_44, %c0_45] : memref<1x32xf32, #tpu.memory_space<vmem>>, vector<1x32xf32>
      tpu.vector_store %arg12[%c0_44, %c0_45], %87 {strides = array<i32>} : memref<1x32xf32, #tpu.memory_space<vmem>>, vector<1x32xf32>,
    } else {
    }
    %c0 = arith.constant 0 : index
    %c0_1 = arith.constant 0 : index
    %3 = vector.load %arg7[%c0, %c0_1] : memref<1x32xf32, #tpu.memory_space<vmem>>, vector<1x32xf32>
    %c0_2 = arith.constant 0 : index
    %c0_3 = arith.constant 0 : index
    %c0_4 = arith.constant 0 : index
    %4 = vector.load %arg3[%c0_2, %c0_3, %c0_4] : memref<1x1x32xf32, #tpu.memory_space<vmem>>, vector<1x1x32xf32>
    %c0_5 = arith.constant 0 : index
    %c0_6 = arith.constant 0 : index
    %c0_7 = arith.constant 0 : index
    %5 = vector.load %arg4[%c0_5, %c0_6, %c0_7] : memref<1x1x32xf32, #tpu.memory_space<vmem>>, vector<1x1x32xf32>
    %c0_8 = arith.constant 0 : index
    %c0_9 = arith.constant 0 : index
    %c0_10 = arith.constant 0 : index
    %6 = vector.load %arg5[%c0_8, %c0_9, %c0_10] : memref<1x1x32xf32, #tpu.memory_space<vmem>>, vector<1x1x32xf32>
    %c0_11 = arith.constant 0 : index
    %c0_12 = arith.constant 0 : index
    %c0_13 = arith.constant 0 : index
    %7 = vector.load %arg6[%c0_11, %c0_12, %c0_13] : memref<1x1x32xf32, #tpu.memory_space<vmem>>, vector<1x1x32xf32>
    %c0_14 = arith.constant 0 : index
    %c0_15 = arith.constant 0 : index
    %8 = vector.load %arg12[%c0_14, %c0_15] : memref<1x32xf32, #tpu.memory_space<vmem>>, vector<1x32xf32>
    %c0_i32_16 = arith.constant 0 : i32
    %c8_i32 = arith.constant 8 : i32
    %9 = arith.muli %c0_i32_16, %c8_i32 : i32
    %10 = tpu.assume_multiple %9, 8 : i32
    %c0_17 = arith.constant 0 : index
    %11 = arith.index_cast %10 : i32 to index
    %c0_18 = arith.constant 0 : index
    %12 = vector.load %arg2[%c0_17, %11, %c0_18] : memref<1x8x32xf32, #tpu.memory_space<vmem>>, vector<1x8x32xf32>
    %13 = vector.extract_strided_slice %12 {offsets = [0, 0, 0], sizes = [1, 1, 32], strides = [1, 1, 1]} : vector<1x8x32xf32> to vector<1x1x32xf32>
    %14 = vector.shape_cast %13 : vector<1x1x32xf32> to vector<1x32xf32>
    %15 = arith.mulf %8, %3 : vector<1x32xf32>
    %16 = arith.addf %14, %15 : vector<1x32xf32>
    %17 = vector.extract_strided_slice %12 {offsets = [0, 1, 0], sizes = [1, 1, 32], strides = [1, 1, 1]} : vector<1x8x32xf32> to vector<1x1x32xf32>
    %18 = vector.shape_cast %17 : vector<1x1x32xf32> to vector<1x32xf32>
    %19 = arith.mulf %16, %3 : vector<1x32xf32>
    %20 = arith.addf %18, %19 : vector<1x32xf32>
    %21 = vector.extract_strided_slice %12 {offsets = [0, 2, 0], sizes = [1, 1, 32], strides = [1, 1, 1]} : vector<1x8x32xf32> to vector<1x1x32xf32>
    %22 = vector.shape_cast %21 : vector<1x1x32xf32> to vector<1x32xf32>
    %23 = arith.mulf %20, %3 : vector<1x32xf32>
    %24 = arith.addf %22, %23 : vector<1x32xf32>
    %25 = vector.extract_strided_slice %12 {offsets = [0, 3, 0], sizes = [1, 1, 32], strides = [1, 1, 1]} : vector<1x8x32xf32> to vector<1x1x32xf32>
    %26 = vector.shape_cast %25 : vector<1x1x32xf32> to vector<1x32xf32>
    %27 = arith.mulf %24, %3 : vector<1x32xf32>
    %28 = arith.addf %26, %27 : vector<1x32xf32>
    %29 = vector.extract_strided_slice %12 {offsets = [0, 4, 0], sizes = [1, 1, 32], strides = [1, 1, 1]} : vector<1x8x32xf32> to vector<1x1x32xf32>
    %30 = vector.shape_cast %29 : vector<1x1x32xf32> to vector<1x32xf32>
    %31 = arith.mulf %28, %3 : vector<1x32xf32>
    %32 = arith.addf %30, %31 : vector<1x32xf32>
    %33 = vector.extract_strided_slice %12 {offsets = [0, 5, 0], sizes = [1, 1, 32], strides = [1, 1, 1]} : vector<1x8x32xf32> to vector<1x1x32xf32>
    %34 = vector.shape_cast %33 : vector<1x1x32xf32> to vector<1x32xf32>
    %35 = arith.mulf %32, %3 : vector<1x32xf32>
    %36 = arith.addf %34, %35 : vector<1x32xf32>
    %37 = vector.extract_strided_slice %12 {offsets = [0, 6, 0], sizes = [1, 1, 32], strides = [1, 1, 1]} : vector<1x8x32xf32> to vector<1x1x32xf32>
    %38 = vector.shape_cast %37 : vector<1x1x32xf32> to vector<1x32xf32>
    %39 = arith.mulf %36, %3 : vector<1x32xf32>
    %40 = arith.addf %38, %39 : vector<1x32xf32>
    %41 = vector.extract_strided_slice %12 {offsets = [0, 7, 0], sizes = [1, 1, 32], strides = [1, 1, 1]} : vector<1x8x32xf32> to vector<1x1x32xf32>
    %42 = vector.shape_cast %41 : vector<1x1x32xf32> to vector<1x32xf32>
    %43 = arith.mulf %40, %3 : vector<1x32xf32>
    %44 = arith.addf %42, %43 : vector<1x32xf32>
    %45 = vector.shape_cast %8 : vector<1x32xf32> to vector<1x1x32xf32>
    %46 = vector.shape_cast %16 : vector<1x32xf32> to vector<1x1x32xf32>
    %47 = vector.shape_cast %20 : vector<1x32xf32> to vector<1x1x32xf32>
    %48 = vector.shape_cast %24 : vector<1x32xf32> to vector<1x1x32xf32>
    %49 = vector.shape_cast %28 : vector<1x32xf32> to vector<1x1x32xf32>
    %50 = vector.shape_cast %32 : vector<1x32xf32> to vector<1x1x32xf32>
    %51 = vector.shape_cast %36 : vector<1x32xf32> to vector<1x1x32xf32>
    %52 = vector.shape_cast %40 : vector<1x32xf32> to vector<1x1x32xf32>
    %53 = tpu.concatenate %45, %46, %47, %48, %49, %50, %51, %52 in 1 : vector<1x1x32xf32>, vector<1x1x32xf32>, vector<1x1x32xf32>, vector<1x1x32xf32>, vector<1x1x32xf32>, vector<1x1x32xf32>, vector<1x1x32xf32>, vector<1x1x32xf32> -> vector<1x8x32xf32>
    %54 = vector.broadcast %4 : vector<1x1x32xf32> to vector<1x8x32xf32>
    %55 = arith.mulf %12, %54 : vector<1x8x32xf32>
    %56 = vector.broadcast %5 : vector<1x1x32xf32> to vector<1x8x32xf32>
    %57 = arith.mulf %53, %56 : vector<1x8x32xf32>
    %58 = arith.addf %55, %57 : vector<1x8x32xf32>
    %c0_19 = arith.constant 0 : index
    %59 = arith.index_cast %10 : i32 to index
    %c0_20 = arith.constant 0 : index
    %60 = vector.load %arg13[%c0_19, %59, %c0_20] : memref<1x8x32xf32, #tpu.memory_space<vmem>>, vector<1x8x32xf32>
    tpu.vector_store %arg13[%c0_19, %59, %c0_20], %58 {strides = array<i32>} : memref<1x8x32xf32, #tpu.memory_space<vmem>>, vector<1x8x32xf32>,
    %61 = vector.broadcast %6 : vector<1x1x32xf32> to vector<1x8x32xf32>
    %62 = arith.mulf %12, %61 : vector<1x8x32xf32>
    %63 = vector.broadcast %7 : vector<1x1x32xf32> to vector<1x8x32xf32>
    %64 = arith.mulf %53, %63 : vector<1x8x32xf32>
    %65 = arith.addf %62, %64 : vector<1x8x32xf32>
    %c0_21 = arith.constant 0 : index
    %66 = arith.index_cast %10 : i32 to index
    %c0_22 = arith.constant 0 : index
    %67 = vector.load %arg14[%c0_21, %66, %c0_22] : memref<1x8x32xf32, #tpu.memory_space<vmem>>, vector<1x8x32xf32>
    tpu.vector_store %arg14[%c0_21, %66, %c0_22], %65 {strides = array<i32>} : memref<1x8x32xf32, #tpu.memory_space<vmem>>, vector<1x8x32xf32>,
    %c1_i32 = arith.constant 1 : i32
    %c0_23 = arith.constant 0 : index
    %c0_24 = arith.constant 0 : index
    %68 = vector.load %arg12[%c0_23, %c0_24] : memref<1x32xf32, #tpu.memory_space<vmem>>, vector<1x32xf32>
    tpu.vector_store %arg12[%c0_23, %c0_24], %44 {strides = array<i32>} : memref<1x32xf32, #tpu.memory_space<vmem>>, vector<1x32xf32>,
    %c0_25 = arith.constant 0 : index
    %c0_26 = arith.constant 0 : index
    %c0_27 = arith.constant 0 : index
    %69 = vector.load %arg13[%c0_25, %c0_26, %c0_27] : memref<1x8x32xf32, #tpu.memory_space<vmem>>, vector<1x8x32xf32>
    %70 = vector.shape_cast %69 : vector<1x8x32xf32> to vector<8x32xf32>
    %c0_28 = arith.constant 0 : index
    %c0_29 = arith.constant 0 : index
    %c0_30 = arith.constant 0 : index
    %71 = vector.load %arg14[%c0_28, %c0_29, %c0_30] : memref<1x8x32xf32, #tpu.memory_space<vmem>>, vector<1x8x32xf32>
    %72 = vector.shape_cast %71 : vector<1x8x32xf32> to vector<8x32xf32>
    %c0_31 = arith.constant 0 : index
    %c0_32 = arith.constant 0 : index
    %73 = vector.load %arg8[%c0_31, %c0_32] : memref<32x32xf32, #tpu.memory_space<vmem>>, vector<32x32xf32>
    %cst = arith.constant dense<0.000000e+00> : vector<8x32xf32>
    %74 = tpu.matmul %70, %73, %cst {dimension_numbers = #tpu.dot_dimension_numbers<[1], [0], [0], [1], [0, 0, 1, 1], [], []>} : vector<8x32xf32>, vector<32x32xf32>, vector<8x32xf32> -> vector<8x32xf32>
    %c0_33 = arith.constant 0 : index
    %c0_34 = arith.constant 0 : index
    %75 = vector.load %arg9[%c0_33, %c0_34] : memref<32x32xf32, #tpu.memory_space<vmem>>, vector<32x32xf32>
    %cst_35 = arith.constant dense<0.000000e+00> : vector<8x32xf32>
    %76 = tpu.matmul %72, %75, %cst_35 {dimension_numbers = #tpu.dot_dimension_numbers<[1], [0], [0], [1], [0, 0, 1, 1], [], []>} : vector<8x32xf32>, vector<32x32xf32>, vector<8x32xf32> -> vector<8x32xf32>
    %77 = arith.negf %76 : vector<8x32xf32>
    %78 = math.exp %77 : vector<8x32xf32>
    %cst_36 = arith.constant 1.000000e+00 : f32
    %79 = vector.broadcast %cst_36 : f32 to vector<8x32xf32>
    %80 = arith.addf %79, %78 : vector<8x32xf32>
    %81 = arith.divf %79, %80 : vector<8x32xf32>
    %c0_37 = arith.constant 0 : index
    %c0_38 = arith.constant 0 : index
    %82 = vector.load %arg10[%c0_37, %c0_38] : memref<32x32xf32, #tpu.memory_space<vmem>>, vector<32x32xf32>
    %cst_39 = arith.constant dense<0.000000e+00> : vector<8x32xf32>
    %83 = tpu.matmul %74, %82, %cst_39 {dimension_numbers = #tpu.dot_dimension_numbers<[1], [0], [0], [1], [0, 0, 1, 1], [], []>} : vector<8x32xf32>, vector<32x32xf32>, vector<8x32xf32> -> vector<8x32xf32>
    %84 = arith.mulf %81, %83 : vector<8x32xf32>
    %85 = vector.shape_cast %84 : vector<8x32xf32> to vector<1x8x32xf32>
    %c0_40 = arith.constant 0 : index
    %c0_41 = arith.constant 0 : index
    %c0_42 = arith.constant 0 : index
    %86 = vector.load %arg11[%c0_40, %c0_41, %c0_42] : memref<1x8x32xf32, #tpu.memory_space<vmem>>, vector<1x8x32xf32>
    tpu.vector_store %arg11[%c0_40, %c0_41, %c0_42], %85 {strides = array<i32>} : memref<1x8x32xf32, #tpu.memory_space<vmem>>, vector<1x8x32xf32>,
    return
  }
  func.func @transform_0(%arg0: i32, %arg1: i32) -> (i32, i32, i32) {
    %c0_i32 = arith.constant 0 : i32
    %c0_i32_0 = arith.constant 0 : i32
    return %arg0, %arg1, %c0_i32 : i32, i32, i32
  }
  func.func @transform_1(%arg0: i32, %arg1: i32) -> (i32, i32, i32) {
    %c0_i32 = arith.constant 0 : i32
    %c0_i32_0 = arith.constant 0 : i32
    %c0_i32_1 = arith.constant 0 : i32
    %c0_i32_2 = arith.constant 0 : i32
    return %c0_i32, %c0_i32_0, %c0_i32_1 : i32, i32, i32
  }
  func.func @transform_2(%arg0: i32, %arg1: i32) -> (i32, i32, i32) {
    %c0_i32 = arith.constant 0 : i32
    %c0_i32_0 = arith.constant 0 : i32
    %c0_i32_1 = arith.constant 0 : i32
    %c0_i32_2 = arith.constant 0 : i32
    return %c0_i32, %c0_i32_0, %c0_i32_1 : i32, i32, i32
  }
  func.func @transform_3(%arg0: i32, %arg1: i32) -> (i32, i32, i32) {
    %c0_i32 = arith.constant 0 : i32
    %c0_i32_0 = arith.constant 0 : i32
    %c0_i32_1 = arith.constant 0 : i32
    %c0_i32_2 = arith.constant 0 : i32
    return %c0_i32, %c0_i32_0, %c0_i32_1 : i32, i32, i32
  }
  func.func @transform_4(%arg0: i32, %arg1: i32) -> (i32, i32, i32) {
    %c0_i32 = arith.constant 0 : i32
    %c0_i32_0 = arith.constant 0 : i32
    %c0_i32_1 = arith.constant 0 : i32
    %c0_i32_2 = arith.constant 0 : i32
    return %c0_i32, %c0_i32_0, %c0_i32_1 : i32, i32, i32
  }
  func.func @transform_5(%arg0: i32, %arg1: i32) -> (i32, i32) {
    %c0_i32 = arith.constant 0 : i32
    %c0_i32_0 = arith.constant 0 : i32
    %c0_i32_1 = arith.constant 0 : i32
    return %c0_i32, %c0_i32_0 : i32, i32
  }
  func.func @transform_6(%arg0: i32, %arg1: i32) -> (i32, i32) {
    %c0_i32 = arith.constant 0 : i32
    %c0_i32_0 = arith.constant 0 : i32
    %c0_i32_1 = arith.constant 0 : i32
    return %c0_i32, %c0_i32_0 : i32, i32
  }
  func.func @transform_7(%arg0: i32, %arg1: i32) -> (i32, i32) {
    %c0_i32 = arith.constant 0 : i32
    %c0_i32_0 = arith.constant 0 : i32
    %c0_i32_1 = arith.constant 0 : i32
    return %c0_i32, %c0_i32_0 : i32, i32
  }
  func.func @transform_8(%arg0: i32, %arg1: i32) -> (i32, i32) {
    %c0_i32 = arith.constant 0 : i32
    %c0_i32_0 = arith.constant 0 : i32
    %c0_i32_1 = arith.constant 0 : i32
    return %c0_i32, %c0_i32_0 : i32, i32
  }
  func.func @transform_9(%arg0: i32, %arg1: i32) -> (i32, i32, i32) {
    %c0_i32 = arith.constant 0 : i32
    %c0_i32_0 = arith.constant 0 : i32
    return %arg0, %arg1, %c0_i32 : i32, i32, i32
  }
}

</mosaic_0001>

<llo_original>
// kernel: tpu_custom_call.1
$region0: #{tpu_custom_call.1}
  #allocation0 [shape = 'u32[]', space=smem, size = 0x4, offset = 0x4, fixed_abs, tag = 'smem constant byte address 0x4 - core index']
  #allocation1 [shape = 'u32[72,128]{1,0:T(1,128)}', space=vmem, size = 0x9000, scoped, tag = 'internal scratch']
  #allocation2 [shape = 'f32[1,32]{1,0:T(1,128)}', space=vmem, size = 0x200, scoped, tag = 'scratch operand']
  #allocation3 [shape = 'f32[1,8,32]{2,1,0:T(8,128)}', space=vmem, size = 0x1000, scoped, tag = 'scratch operand']
  #allocation4 [shape = 'f32[1,8,32]{2,1,0:T(8,128)}', space=vmem, size = 0x1000, scoped, tag = 'scratch operand']
  %s0 = inlined_call_operand.hbm [shape: f32[2,16,32], index: 0, kind: input, shape index: {}]
  %s1 = inlined_call_operand.hbm [shape: f32[1,1,32], index: 1, kind: input, shape index: {}]
  %s2 = inlined_call_operand.vmem [shape: f32[1,1,32], index: 2, kind: input, shape index: {}]
  %s3 = inlined_call_operand.vmem [shape: f32[1,1,32], index: 3, kind: input, shape index: {}]
  %s4 = inlined_call_operand.vmem [shape: f32[1,1,32], index: 4, kind: input, shape index: {}]
  %s5 = inlined_call_operand.vmem [shape: f32[1,32], index: 5, kind: input, shape index: {}]
  %s6 = inlined_call_operand.hbm [shape: f32[32,32], index: 6, kind: input, shape index: {}]
  %s7 = inlined_call_operand.hbm [shape: f32[32,32], index: 7, kind: input, shape index: {}]
  %s8 = inlined_call_operand.hbm [shape: f32[32,32], index: 8, kind: input, shape index: {}]
  %s9 = inlined_call_operand.hbm [shape: f32[2,16,32], index: 9, kind: output, shape index: {}]
  %s10 = sld [smem:[#allocation0]]
  $region93: #{tpu_custom_call.1} parent=0
    _
  %s12 = ssub.s32 1, %s10
  %s13 = scalar_select 0, %s12, %s10
  $region1: #{tpu_custom_call.1} parent=0
    #allocation5 [shape = 'u8[8192]{0}', space=vmem, size = 0x2000, scoped, tag = 'input window, operand 0']
    #allocation6 [shape = 's32[2]{0}', space=sflag, size = 0x8, scoped, tag = 'scoped memory for tpu_custom_call.1']
    #allocation7 [shape = 's32[2]{0}', space=sflag, size = 0x8, scoped, tag = 'scoped memory for tpu_custom_call.1']
    #allocation8 [shape = 'u8[512]{0}', space=vmem, size = 0x400, scoped, tag = 'input window, operand 1, single buffered']
    #allocation9 [shape = 's32[1]{0}', space=sflag, size = 0x4, scoped, tag = 'scoped memory for tpu_custom_call.1']
    #allocation10 [shape = 'u8[16384]{0}', space=vmem, size = 0x4000, scoped, tag = 'input window, operand 6, single buffered']
    #allocation11 [shape = 'u8[16384]{0}', space=vmem, size = 0x4000, scoped, tag = 'input window, operand 7, single buffered']
    #allocation12 [shape = 's32[1]{0}', space=sflag, size = 0x4, scoped, tag = 'scoped memory for tpu_custom_call.1']
    #allocation13 [shape = 'u8[16384]{0}', space=vmem, size = 0x4000, scoped, tag = 'input window, operand 8, single buffered']
    #allocation14 [shape = 'u8[8192]{0}', space=vmem, size = 0x2000, scoped, tag = 'output window, operand 0']
    %14 = vsyncpa [#allocation6], 0
    %s15 = scalar_lea.sflag [#allocation6], 1
    %16 = vsyncpa %s15, 0
    %17 = vsyncpa [#allocation9], 0
    %18 = vsyncpa [#allocation12], 0
    %19 = vsyncpa [#allocation7], 0
    %s20 = scalar_lea.sflag [#allocation7], 1
    %21 = vsyncpa %s20, 0
    loop: start=0, step=1, limit=6
    $region2: #{tpu_custom_call.1} parent=1 // loop_pre_header
      _
    $region3: #{tpu_custom_call.1} parent=1 // loop_header
      %s23 = sphi 0, %s27
      %p24 = scmp.ge.s32.totalorder %s23, 6
      %s30 = sphi 0, %s42
      %s31 = sphi 0, %s38
      %s32 = sphi 0, %s30
      %s33 = sphi 0, %s31
      %s34 = sphi 0, %s32
      %s35 = sphi 0, %s33
      %s47 = sphi 0, %s49
      %s50 = sphi 0, %s47
      %s51 = sphi 0, %s50
      %s67 = sphi 0, %s51
      %s71 = sphi 0, %s71
      %s73 = sphi 0, %s71
      %s74 = sphi 0, %s73
      %s88 = sphi 0, %s74
      %s92 = sphi 0, %s92
      %s94 = sphi 0, %s92
      %s95 = sphi 0, %s94
      %s109 = sphi 0, %s95
      %s113 = sphi 0, %s113
      %s115 = sphi 0, %s113
      %s116 = sphi 0, %s115
      %s130 = sphi 0, %s116
      %s134 = sphi 0, %s134
      %s136 = sphi 0, %s134
      %s137 = sphi 0, %s136
      %s151 = sphi 0, %s137
      %s155 = sphi 0, %s155
      %s157 = sphi 0, %s155
      %s158 = sphi 0, %s157
      %s172 = sphi 0, %s158
      %s176 = sphi 0, %s176
      %s178 = sphi 0, %s176
      %s179 = sphi 0, %s178
      %s193 = sphi 0, %s179
      %s197 = sphi 0, %s197
      %s199 = sphi 0, %s197
      %s200 = sphi 0, %s199
      %s214 = sphi 0, %s200
      %s218 = sphi 0, %s218
      %s220 = sphi 0, %s218
      %s221 = sphi 0, %s220
      %s235 = sphi 0, %s221
      %s243 = sphi 0, %s245
      %s246 = sphi 0, %s243
      %s247 = sphi 0, %s246
      %s263 = sphi 0, %s247
    $region4: #{tpu_custom_call.1} parent=1 // loop_header_branch
      %26 = sbr.rel (%p24) target = $region8
    $region5: #{tpu_custom_call.1} parent=1 // loop_body
      %s28 = ssub.s32 %s23, 1
      %s29 = ssub.s32 %s23, 2
      %s36 = sadd.s32 1, %s31
      %p37 = scmp.ge.s32.totalorder %s36, 2
      %s38 = scalar_select %p37, 0, %s36
      %s39 = sadd.s32 1, %s30
      %s40 = scalar_select %p37, %s39, %s30
      %p41 = scmp.ge.s32.totalorder %s40, 2
      %s42 = scalar_select %p41, 0, %s40
      %s43 = ssub.s32 %s30, %s42
      %s44 = ssub.s32 %s31, %s38
      %s45 = sor.u32 %s43, %s44
      %p46 = scmp.eq.s32.totalorder %s45, 0
      %s48 = sadd.s32 %s47, 1
      %s49 = scalar_select %p46, %s47, %s48
      %p52 = pneg %p46
      %p53 = scmp.eq.s32.totalorder %s23, 3
      %p54 = por %p52, %p53
      %p55 = scmp.ne.s32.totalorder %s47, %s50
      %p56 = scmp.eq.s32.totalorder %s23, 0
      %p57 = por %p55, %p56
      %p58 = scmp.ne.s32.totalorder %s47, %s50
      %p59 = scmp.eq.s32.totalorder %s28, 3
      %p60 = por %p58, %p59
      %p61 = scmp.ne.s32.totalorder %s50, %s51
      %p62 = scmp.eq.s32.totalorder %s28, 0
      %p63 = por %p61, %p62
      %p64 = scmp.ne.s32.totalorder %s50, %s51
      %p65 = scmp.eq.s32.totalorder %s29, 3
      %p66 = por %p64, %p65
      %p68 = scmp.ne.s32.totalorder %s51, %s67
      %p69 = scmp.eq.s32.totalorder %s29, 0
      %p70 = por %p68, %p69
      %s72 = sadd.s32 %s71, 1
      %p75 = scmp.eq.s32.totalorder %s23, 3
      %p76 = scmp.ne.s32.totalorder %s71, %s73
      %p77 = scmp.eq.s32.totalorder %s23, 0
      %p78 = por %p76, %p77
      %p79 = scmp.ne.s32.totalorder %s71, %s73
      %p80 = scmp.eq.s32.totalorder %s28, 3
      %p81 = por %p79, %p80
      %p82 = scmp.ne.s32.totalorder %s73, %s74
      %p83 = scmp.eq.s32.totalorder %s28, 0
      %p84 = por %p82, %p83
      %p85 = scmp.ne.s32.totalorder %s73, %s74
      %p86 = scmp.eq.s32.totalorder %s29, 3
      %p87 = por %p85, %p86
      %p89 = scmp.ne.s32.totalorder %s74, %s88
      %p90 = scmp.eq.s32.totalorder %s29, 0
      %p91 = por %p89, %p90
      %s93 = sadd.s32 %s92, 1
      %p96 = scmp.eq.s32.totalorder %s23, 3
      %p97 = scmp.ne.s32.totalorder %s92, %s94
      %p98 = scmp.eq.s32.totalorder %s23, 0
      %p99 = por %p97, %p98
      %p100 = scmp.ne.s32.totalorder %s92, %s94
      %p101 = scmp.eq.s32.totalorder %s28, 3
      %p102 = por %p100, %p101
      %p103 = scmp.ne.s32.totalorder %s94, %s95
      %p104 = scmp.eq.s32.totalorder %s28, 0
      %p105 = por %p103, %p104
      %p106 = scmp.ne.s32.totalorder %s94, %s95
      %p107 = scmp.eq.s32.totalorder %s29, 3
      %p108 = por %p106, %p107
      %p110 = scmp.ne.s32.totalorder %s95, %s109
      %p111 = scmp.eq.s32.totalorder %s29, 0
      %p112 = por %p110, %p111
      %s114 = sadd.s32 %s113, 1
      %p117 = scmp.eq.s32.totalorder %s23, 3
      %p118 = scmp.ne.s32.totalorder %s113, %s115
      %p119 = scmp.eq.s32.totalorder %s23, 0
      %p120 = por %p118, %p119
      %p121 = scmp.ne.s32.totalorder %s113, %s115
      %p122 = scmp.eq.s32.totalorder %s28, 3
      %p123 = por %p121, %p122
      %p124 = scmp.ne.s32.totalorder %s115, %s116
      %p125 = scmp.eq.s32.totalorder %s28, 0
      %p126 = por %p124, %p125
      %p127 = scmp.ne.s32.totalorder %s115, %s116
      %p128 = scmp.eq.s32.totalorder %s29, 3
      %p129 = por %p127, %p128
      %p131 = scmp.ne.s32.totalorder %s116, %s130
      %p132 = scmp.eq.s32.totalorder %s29, 0
      %p133 = por %p131, %p132
      %s135 = sadd.s32 %s134, 1
      %p138 = scmp.eq.s32.totalorder %s23, 3
      %p139 = scmp.ne.s32.totalorder %s134, %s136
      %p140 = scmp.eq.s32.totalorder %s23, 0
      %p141 = por %p139, %p140
      %p142 = scmp.ne.s32.totalorder %s134, %s136
      %p143 = scmp.eq.s32.totalorder %s28, 3
      %p144 = por %p142, %p143
      %p145 = scmp.ne.s32.totalorder %s136, %s137
      %p146 = scmp.eq.s32.totalorder %s28, 0
      %p147 = por %p145, %p146
      %p148 = scmp.ne.s32.totalorder %s136, %s137
      %p149 = scmp.eq.s32.totalorder %s29, 3
      %p150 = por %p148, %p149
      %p152 = scmp.ne.s32.totalorder %s137, %s151
      %p153 = scmp.eq.s32.totalorder %s29, 0
      %p154 = por %p152, %p153
      %s156 = sadd.s32 %s155, 1
      %p159 = scmp.eq.s32.totalorder %s23, 3
      %p160 = scmp.ne.s32.totalorder %s155, %s157
      %p161 = scmp.eq.s32.totalorder %s23, 0
      %p162 = por %p160, %p161
      %p163 = scmp.ne.s32.totalorder %s155, %s157
      %p164 = scmp.eq.s32.totalorder %s28, 3
      %p165 = por %p163, %p164
      %p166 = scmp.ne.s32.totalorder %s157, %s158
      %p167 = scmp.eq.s32.totalorder %s28, 0
      %p168 = por %p166, %p167
      %p169 = scmp.ne.s32.totalorder %s157, %s158
      %p170 = scmp.eq.s32.totalorder %s29, 3
      %p171 = por %p169, %p170
      %p173 = scmp.ne.s32.totalorder %s158, %s172
      %p174 = scmp.eq.s32.totalorder %s29, 0
      %p175 = por %p173, %p174
      %s177 = sadd.s32 %s176, 1
      %p180 = scmp.eq.s32.totalorder %s23, 3
      %p181 = scmp.ne.s32.totalorder %s176, %s178
      %p182 = scmp.eq.s32.totalorder %s23, 0
      %p183 = por %p181, %p182
      %p184 = scmp.ne.s32.totalorder %s176, %s178
      %p185 = scmp.eq.s32.totalorder %s28, 3
      %p186 = por %p184, %p185
      %p187 = scmp.ne.s32.totalorder %s178, %s179
      %p188 = scmp.eq.s32.totalorder %s28, 0
      %p189 = por %p187, %p188
      %p190 = scmp.ne.s32.totalorder %s178, %s179
      %p191 = scmp.eq.s32.totalorder %s29, 3
      %p192 = por %p190, %p191
      %p194 = scmp.ne.s32.totalorder %s179, %s193
      %p195 = scmp.eq.s32.totalorder %s29, 0
      %p196 = por %p194, %p195
      %s198 = sadd.s32 %s197, 1
      %p201 = scmp.eq.s32.totalorder %s23, 3
      %p202 = scmp.ne.s32.totalorder %s197, %s199
      %p203 = scmp.eq.s32.totalorder %s23, 0
      %p204 = por %p202, %p203
      %p205 = scmp.ne.s32.totalorder %s197, %s199
      %p206 = scmp.eq.s32.totalorder %s28, 3
      %p207 = por %p205, %p206
      %p208 = scmp.ne.s32.totalorder %s199, %s200
      %p209 = scmp.eq.s32.totalorder %s28, 0
      %p210 = por %p208, %p209
      %p211 = scmp.ne.s32.totalorder %s199, %s200
      %p212 = scmp.eq.s32.totalorder %s29, 3
      %p213 = por %p211, %p212
      %p215 = scmp.ne.s32.totalorder %s200, %s214
      %p216 = scmp.eq.s32.totalorder %s29, 0
      %p217 = por %p215, %p216
      %s219 = sadd.s32 %s218, 1
      %p222 = scmp.eq.s32.totalorder %s23, 3
      %p223 = scmp.ne.s32.totalorder %s218, %s220
      %p224 = scmp.eq.s32.totalorder %s23, 0
      %p225 = por %p223, %p224
      %p226 = scmp.ne.s32.totalorder %s218, %s220
      %p227 = scmp.eq.s32.totalorder %s28, 3
      %p228 = por %p226, %p227
      %p229 = scmp.ne.s32.totalorder %s220, %s221
      %p230 = scmp.eq.s32.totalorder %s28, 0
      %p231 = por %p229, %p230
      %p232 = scmp.ne.s32.totalorder %s220, %s221
      %p233 = scmp.eq.s32.totalorder %s29, 3
      %p234 = por %p232, %p233
      %p236 = scmp.ne.s32.totalorder %s221, %s235
      %p237 = scmp.eq.s32.totalorder %s29, 0
      %p238 = por %p236, %p237
      %s239 = ssub.s32 %s30, %s42
      %s240 = ssub.s32 %s31, %s38
      %s241 = sor.u32 %s239, %s240
      %p242 = scmp.eq.s32.totalorder %s241, 0
      %s244 = sadd.s32 %s243, 1
      %s245 = scalar_select %p242, %s243, %s244
      %p248 = pneg %p242
      %p249 = scmp.eq.s32.totalorder %s23, 3
      %p250 = por %p248, %p249
      %p251 = scmp.ne.s32.totalorder %s243, %s246
      %p252 = scmp.eq.s32.totalorder %s23, 0
      %p253 = por %p251, %p252
      %p254 = scmp.ne.s32.totalorder %s243, %s246
      %p255 = scmp.eq.s32.totalorder %s28, 3
      %p256 = por %p254, %p255
      %p257 = scmp.ne.s32.totalorder %s246, %s247
      %p258 = scmp.eq.s32.totalorder %s28, 0
      %p259 = por %p257, %p258
      %p260 = scmp.ne.s32.totalorder %s246, %s247
      %p261 = scmp.eq.s32.totalorder %s29, 3
      %p262 = por %p260, %p261
      %p264 = scmp.ne.s32.totalorder %s247, %s263
      %p265 = scmp.eq.s32.totalorder %s29, 0
      %p266 = por %p264, %p265
      %p267 = scmp.le.s32.totalorder 1, %s23
      %p268 = scmp.lt.s32.totalorder %s23, 5
      %p269 = pnand %p267, %p268
      %p270 = pneg %p269
      // Predicated region
      $region9: #{tpu_custom_call.1} parent=5 // pred_check
        _
      $region10: #{tpu_custom_call.1} parent=5 // pred_check_branch
        %272 = sbr.rel (%p269) target = $region12
      $region11: #{tpu_custom_call.1} parent=5 // pred_region
        %s273 = ssub.s32 %s23, 1
        // Predicated region
        $region13: #{tpu_custom_call.1} parent=11 // pred_check
          %p274 = pneg %p84
        $region14: #{tpu_custom_call.1} parent=11 // pred_check_branch
          %276 = sbr.rel (%p274) target = $region16
        $region15: #{tpu_custom_call.1} parent=11 // pred_region
          %278 = vsyncadd [#allocation9], 0
          %s280 = sshll.u32 %s1, 4
          %s281 = int_to_ptr.hbm [resolvable:$true] %s280
          %s282 = sshll.u32 [#allocation8], 4
          %s283 = int_to_ptr.vmem [resolvable:$true] %s282
          %285 = dma.hbm_to_vmem [thread:$0]  %s281, 16, %s283, [#allocation9]
        $region16: #{tpu_custom_call.1} parent=11 // pred_fallthru
          _
        // Predicated region
        $region17: #{tpu_custom_call.1} parent=11 // pred_check
          %p286 = pneg %p105
        $region18: #{tpu_custom_call.1} parent=11 // pred_check_branch
          %288 = sbr.rel (%p286) target = $region20
        $region19: #{tpu_custom_call.1} parent=11 // pred_region
          _
        $region20: #{tpu_custom_call.1} parent=11 // pred_fallthru
          _
        // Predicated region
        $region21: #{tpu_custom_call.1} parent=11 // pred_check
          %p289 = pneg %p126
        $region22: #{tpu_custom_call.1} parent=11 // pred_check_branch
          %291 = sbr.rel (%p289) target = $region24
        $region23: #{tpu_custom_call.1} parent=11 // pred_region
          _
        $region24: #{tpu_custom_call.1} parent=11 // pred_fallthru
          _
        // Predicated region
        $region25: #{tpu_custom_call.1} parent=11 // pred_check
          %p292 = pneg %p147
        $region26: #{tpu_custom_call.1} parent=11 // pred_check_branch
          %294 = sbr.rel (%p292) target = $region28
        $region27: #{tpu_custom_call.1} parent=11 // pred_region
          _
        $region28: #{tpu_custom_call.1} parent=11 // pred_fallthru
          _
        // Predicated region
        $region29: #{tpu_custom_call.1} parent=11 // pred_check
          %p295 = pneg %p168
        $region30: #{tpu_custom_call.1} parent=11 // pred_check_branch
          %297 = sbr.rel (%p295) target = $region32
        $region31: #{tpu_custom_call.1} parent=11 // pred_region
          _
        $region32: #{tpu_custom_call.1} parent=11 // pred_fallthru
          _
        // Predicated region
        $region33: #{tpu_custom_call.1} parent=11 // pred_check
          %p298 = pneg %p189
        $region34: #{tpu_custom_call.1} parent=11 // pred_check_branch
          %300 = sbr.rel (%p298) target = $region36
        $region35: #{tpu_custom_call.1} parent=11 // pred_region
          %302 = vsyncadd [#allocation9], 0
          %s303 = sshll.u32 %s6, 4
          %s304 = int_to_ptr.hbm [resolvable:$true] %s303
          %s305 = sshll.u32 [#allocation10], 4
          %s306 = int_to_ptr.vmem [resolvable:$true] %s305
          %311 = dma.hbm_to_vmem [thread:$0]  %s304, 512, %s306, [#allocation9], 128, 128, 8
        $region36: #{tpu_custom_call.1} parent=11 // pred_fallthru
          _
        // Predicated region
        $region37: #{tpu_custom_call.1} parent=11 // pred_check
          %p312 = pneg %p210
        $region38: #{tpu_custom_call.1} parent=11 // pred_check_branch
          %314 = sbr.rel (%p312) target = $region40
        $region39: #{tpu_custom_call.1} parent=11 // pred_region
          %316 = vsyncadd [#allocation12], 0
          %s317 = sshll.u32 %s7, 4
          %s318 = int_to_ptr.hbm [resolvable:$true] %s317
          %s319 = sshll.u32 [#allocation11], 4
          %s320 = int_to_ptr.vmem [resolvable:$true] %s319
          %325 = dma.hbm_to_vmem [thread:$0]  %s318, 512, %s320, [#allocation12], 128, 128, 8
        $region40: #{tpu_custom_call.1} parent=11 // pred_fallthru
          _
        // Predicated region
        $region41: #{tpu_custom_call.1} parent=11 // pred_check
          %p326 = pneg %p231
        $region42: #{tpu_custom_call.1} parent=11 // pred_check_branch
          %328 = sbr.rel (%p326) target = $region44
        $region43: #{tpu_custom_call.1} parent=11 // pred_region
          %330 = vsyncadd [#allocation12], 0
          %s331 = sshll.u32 %s8, 4
          %s332 = int_to_ptr.hbm [resolvable:$true] %s331
          %s333 = sshll.u32 [#allocation13], 4
          %s334 = int_to_ptr.vmem [resolvable:$true] %s333
          %339 = dma.hbm_to_vmem [thread:$0]  %s332, 512, %s334, [#allocation12], 128, 128, 8
        $region44: #{tpu_custom_call.1} parent=11 // pred_fallthru
          _
      $region12: #{tpu_custom_call.1} parent=5 // pred_fallthru
        _
      %p340 = scmp.lt.s32.totalorder %s23, 4
      // Predicated region
      $region45: #{tpu_custom_call.1} parent=5 // pred_check
        %p341 = pneg %p340
      $region46: #{tpu_custom_call.1} parent=5 // pred_check_branch
        %343 = sbr.rel (%p341) target = $region48
      $region47: #{tpu_custom_call.1} parent=5 // pred_region
        // Predicated region
        $region49: #{tpu_custom_call.1} parent=47 // pred_check
          %p344 = pneg %p57
        $region50: #{tpu_custom_call.1} parent=47 // pred_check_branch
          %346 = sbr.rel (%p344) target = $region52
        $region51: #{tpu_custom_call.1} parent=47 // pred_region
          %s347 = sand.u32 %s47, 1
          %s348 = scalar_lea.sflag [#allocation6], %s347
          %s349 = sand.u32 %s47, 1
          %s350 = smul.addr %s349, 8
          %s351 = scalar_lea.vmem [#allocation5], %s350
          %353 = vsyncadd %s348, 0
          %s354 = smul.addr %s30, 2
          %s355 = sadd.s32 %s31, %s354
          %s356 = smul.addr %s355, 8
          %s357 = scalar_lea.hbm %s0, %s356
          %s359 = sshll.u32 %s357, 4
          %s360 = int_to_ptr.hbm [resolvable:$true] %s359
          %s361 = sshll.u32 %s351, 4
          %s362 = int_to_ptr.vmem [resolvable:$true] %s361
          %364 = dma.hbm_to_vmem [thread:$0]  %s360, 128, %s362, %s348
        $region52: #{tpu_custom_call.1} parent=47 // pred_fallthru
          _
      $region48: #{tpu_custom_call.1} parent=5 // pred_fallthru
        _
      %p365 = scmp.le.s32.totalorder 1, %s23
      %p366 = scmp.lt.s32.totalorder %s23, 5
      %p367 = pnand %p365, %p366
      %p368 = pneg %p367
      // Predicated region
      $region53: #{tpu_custom_call.1} parent=5 // pred_check
        _
      $region54: #{tpu_custom_call.1} parent=5 // pred_check_branch
        %370 = sbr.rel (%p367) target = $region56
      $region55: #{tpu_custom_call.1} parent=5 // pred_region
        %s371 = ssub.s32 %s23, 1
        %s372 = sand.u32 %s50, 1
        %s373 = scalar_lea.sflag [#allocation6], %s372
        %s374 = sand.u32 %s50, 1
        %s375 = smul.addr %s374, 8
        %s376 = scalar_lea.vmem [#allocation5], %s375
        // Predicated region
        $region57: #{tpu_custom_call.1} parent=55 // pred_check
          %p377 = pneg %p63
        $region58: #{tpu_custom_call.1} parent=55 // pred_check_branch
          %379 = sbr.rel (%p377) target = $region60
        $region59: #{tpu_custom_call.1} parent=55 // pred_region
          %381 = dma.done %s373, 128
        $region60: #{tpu_custom_call.1} parent=55 // pred_fallthru
          _
        // Predicated region
        $region61: #{tpu_custom_call.1} parent=55 // pred_check
          %p382 = pneg %p84
        $region62: #{tpu_custom_call.1} parent=55 // pred_check_branch
          %384 = sbr.rel (%p382) target = $region64
        $region63: #{tpu_custom_call.1} parent=55 // pred_region
          %386 = dma.done [#allocation9], 16
        $region64: #{tpu_custom_call.1} parent=55 // pred_fallthru
          _
        // Predicated region
        $region65: #{tpu_custom_call.1} parent=55 // pred_check
          %p387 = pneg %p189
        $region66: #{tpu_custom_call.1} parent=55 // pred_check_branch
          %389 = sbr.rel (%p387) target = $region68
        $region67: #{tpu_custom_call.1} parent=55 // pred_region
          %391 = dma.done [#allocation9], 512
        $region68: #{tpu_custom_call.1} parent=55 // pred_fallthru
          _
        // Predicated region
        $region69: #{tpu_custom_call.1} parent=55 // pred_check
          %p392 = pneg %p210
        $region70: #{tpu_custom_call.1} parent=55 // pred_check_branch
          %394 = sbr.rel (%p392) target = $region72
        $region71: #{tpu_custom_call.1} parent=55 // pred_region
          %396 = dma.done [#allocation12], 512
        $region72: #{tpu_custom_call.1} parent=55 // pred_fallthru
          _
        // Predicated region
        $region73: #{tpu_custom_call.1} parent=55 // pred_check
          %p397 = pneg %p231
        $region74: #{tpu_custom_call.1} parent=55 // pred_check_branch
          %399 = sbr.rel (%p397) target = $region76
        $region75: #{tpu_custom_call.1} parent=55 // pred_region
          %401 = dma.done [#allocation12], 512
        $region76: #{tpu_custom_call.1} parent=55 // pred_fallthru
          _
        %s402 = sand.u32 %s50, 1
        %s403 = scalar_lea.sflag [#allocation6], %s402
        %s404 = sand.u32 %s50, 1
        %s405 = smul.addr %s404, 8
        %s406 = scalar_lea.vmem [#allocation5], %s405
        %p407 = pneg %p63
        %p408 = pneg %p60
        %p409 = pneg %p84
        %p410 = pneg %p81
        %p411 = pneg %p105
        %p412 = pneg %p102
        %p413 = pneg %p126
        %p414 = pneg %p123
        %p415 = pneg %p147
        %p416 = pneg %p144
        %p417 = pneg %p168
        %p418 = pneg %p165
        %p419 = pneg %p189
        %p420 = pneg %p186
        %p421 = pneg %p210
        %p422 = pneg %p207
        %p423 = pneg %p231
        %p424 = pneg %p228
        %p425 = pneg %p259
        %p426 = pneg %p256
        %s427 = sand.u32 %s246, 1
        %s428 = scalar_lea.sflag [#allocation7], %s427
        %s429 = sand.u32 %s246, 1
        %s430 = smul.addr %s429, 8
        %s431 = scalar_lea.vmem [#allocation14], %s430
        %p432 = scmp.eq.s32.totalorder %s33, 0
        // Predicated region
        $region77: #{tpu_custom_call.1} parent=55 // pred_check
          %p433 = pneg %p432
        $region78: #{tpu_custom_call.1} parent=55 // pred_check_branch
          %435 = sbr.rel (%p433) target = $region80
        $region79: #{tpu_custom_call.1} parent=55 // pred_region
          %vm436 = vcmask 253952
          %437 = vst.msk [vmem:[#allocation2] sm:$0x1] %vm436, 0.0
        $region80: #{tpu_custom_call.1} parent=55 // pred_fallthru
          _
        %v438 = vld [vmem:[%s5] sm:$0x1]
        %v439 = vld [vmem:[#allocation8] sm:$0x1]
        %v440 = vld [vmem:[%s2] sm:$0x1]
        %v441 = vld [vmem:[%s3] sm:$0x1]
        %v442 = vld [vmem:[%s4] sm:$0x1]
        %v443 = vld [vmem:[#allocation2] sm:$0x1]
        %v444 = vld [vmem:[%s376] sm:$0xff]
        %v445 = vmul.f32 %v443, %v438
        %v446 = vadd.f32 %v444, %v445
        %v447 = vmul.f32 %v446, %v438
        %v449 = vrot.slane %v447, 7
        %v451 = vadd.f32 %v444, %v449
        %v453 = vperm.slane %v438, 0
        %v455 = vmul.f32 %v451, %v453
        %v457 = vrot.slane %v455, 7
        %v459 = vadd.f32 %v444, %v457
        %v460 = vmul.f32 %v459, %v453
        %v462 = vrot.slane %v460, 7
        %v464 = vadd.f32 %v444, %v462
        %v465 = vmul.f32 %v464, %v453
        %v467 = vrot.slane %v465, 7
        %v469 = vadd.f32 %v444, %v467
        %v470 = vmul.f32 %v469, %v453
        %v472 = vrot.slane %v470, 7
        %v474 = vadd.f32 %v444, %v472
        %v475 = vmul.f32 %v474, %v453
        %v477 = vrot.slane %v475, 7
        %v479 = vadd.f32 %v444, %v477
        %v480 = vmul.f32 %v479, %v453
        %v482 = vrot.slane %v480, 7
        %v484 = vadd.f32 %v444, %v482
        %v486 = vrot.slane %v446, 7
        %v489 = vrot.slane %v451, 7
        %v492 = vrot.slane %v459, 7
        %v495 = vrot.slane %v464, 7
        %v498 = vrot.slane %v469, 7
        %v501 = vrot.slane %v474, 7
        %v504 = vrot.slane %v479, 7
        %vm506 = vcmask 1040384
        %v507 = vsel %vm506, %v443, %v486
        %vm508 = vcmask 1041408
        %v509 = vsel %vm508, %v507, %v489
        %vm510 = vcmask 1042432
        %v511 = vsel %vm510, %v509, %v492
        %vm512 = vcmask 1043456
        %v513 = vsel %vm512, %v511, %v495
        %vm514 = vcmask 1044480
        %v515 = vsel %vm514, %v513, %v498
        %vm516 = vcmask 1045504
        %v517 = vsel %vm516, %v515, %v501
        %vm518 = vcmask 1046528
        %v519 = vsel %vm518, %v517, %v504
        %v521 = vperm.slane %v439, 0
        %v523 = vmul.f32 %v444, %v521
        %v525 = vperm.slane %v440, 0
        %v527 = vmul.f32 %v519, %v525
        %v528 = vadd.f32 %v523, %v527
        %vm529 = vcmask 261120
        %530 = vst.msk [vmem:[#allocation3] sm:$0xff] %vm529, %v528
        %v532 = vperm.slane %v441, 0
        %v534 = vmul.f32 %v444, %v532
        %v536 = vperm.slane %v442, 0
        %v538 = vmul.f32 %v519, %v536
        %v539 = vadd.f32 %v534, %v538
        %540 = vst.msk [vmem:[#allocation4] sm:$0xff] %vm529, %v539
        %vm541 = vcmask 261127
        %542 = vst.msk [vmem:[#allocation2 - $0x7] sm:$0x80] %vm541, %v484
        %v543 = vld [vmem:[#allocation3] sm:$0xff]
        %v544 = vld [vmem:[#allocation4] sm:$0xff]
        %v545 = vld [vmem:[#allocation10] sm:$0xff]
        %v546 = vld [vmem:[#allocation10 + $0x8] sm:$0xff]
        %v547 = vld [vmem:[#allocation10 + $0x10] sm:$0xff]
        %v548 = vld [vmem:[#allocation10 + $0x18] sm:$0xff]
        %v550 = vsel %vm529, %v543, 0
        %552 = vmatpush.msra.mxu0 0.0
        %553 = vmatpush.msra.mxu0 0.0
        %554 = vmatpush.msra.mxu0 0.0
        %555 = vmatpush.msra.mxu0 0.0
        %556 = vmatpush.msra.mxu0 0.0
        %557 = vmatpush.msra.mxu0 0.0
        %558 = vmatpush.msra.mxu0 0.0
        %559 = vmatpush.msra.mxu0 0.0
        %560 = vmatpush.msra.mxu0 0.0
        %561 = vmatpush.msra.mxu0 0.0
        %562 = vmatpush.msra.mxu0 0.0
        %563 = vmatpush.msra.mxu0 0.0
        %564 = vmatpush.msra.mxu0 %v548
        %565 = vmatpush.msra.mxu0 %v547
        %566 = vmatpush.msra.mxu0 %v546
        %567 = vmatpush.msra.mxu0 %v545
        %568 = vmatmul.f32.gmra.mxu0 %v550
        %v569 = vpop.f32.mrf.mxu0
        %v570 = vadd.f32 0.0, %v569
        %571 = vdwg.mxu0
        %v572 = vld [vmem:[#allocation11] sm:$0xff]
        %v573 = vld [vmem:[#allocation11 + $0x8] sm:$0xff]
        %v574 = vld [vmem:[#allocation11 + $0x10] sm:$0xff]
        %v575 = vld [vmem:[#allocation11 + $0x18] sm:$0xff]
        %v577 = vsel %vm529, %v544, 0
        %579 = vmatpush.msra.mxu0 0.0
        %580 = vmatpush.msra.mxu0 0.0
        %581 = vmatpush.msra.mxu0 0.0
        %582 = vmatpush.msra.mxu0 0.0
        %583 = vmatpush.msra.mxu0 0.0
        %584 = vmatpush.msra.mxu0 0.0
        %585 = vmatpush.msra.mxu0 0.0
        %586 = vmatpush.msra.mxu0 0.0
        %587 = vmatpush.msra.mxu0 0.0
        %588 = vmatpush.msra.mxu0 0.0
        %589 = vmatpush.msra.mxu0 0.0
        %590 = vmatpush.msra.mxu0 0.0
        %591 = vmatpush.msra.mxu0 %v575
        %592 = vmatpush.msra.mxu0 %v574
        %593 = vmatpush.msra.mxu0 %v573
        %594 = vmatpush.msra.mxu0 %v572
        %595 = vmatmul.f32.gmra.mxu0 %v577
        %v596 = vpop.f32.mrf.mxu0
        %v597 = vadd.f32 0.0, %v596
        %598 = vdwg.mxu0
        %v599 = vxor.u32 %v597, 2147483648
        %v600 = vmul.f32 %v599, 1.442695
        %v601 = vpow.pop %v600
        %v602 = vadd.f32 %v601, 1.0
        %v603 = vrcp.pop %v602
        %v604 = vmul.f32 %v602, %v603
        %v605 = vsub.f32 1.0, %v604
        %v606 = vmul.f32 %v603, %v605
        %v607 = vadd.f32 %v603, %v606
        %vm608 = vweird.f32 %v602
        %vm609 = vweird.f32 %v603
        %vm610 = vmor %vm608, %vm609
        %v611 = vsel %vm610, %v603, %v607
        %v612 = vand.u32 2147483647, %v602
        %vm613 = vcmp.eq.f32.partialorder %v612, 8.507059e+37
        %v614 = vand.u32 %v602, 2147483648
        %v615 = vor.u32 1.1754944e-38, %v614
        %v616 = vsel %vm613, %v615, %v611
        %v617 = vmul.f32 1.0, %v616
        %v618 = vld [vmem:[#allocation13] sm:$0xff]
        %v619 = vld [vmem:[#allocation13 + $0x8] sm:$0xff]
        %v620 = vld [vmem:[#allocation13 + $0x10] sm:$0xff]
        %v621 = vld [vmem:[#allocation13 + $0x18] sm:$0xff]
        %v623 = vsel %vm529, %v570, 0
        %625 = vmatpush.msra.mxu0 0.0
        %626 = vmatpush.msra.mxu0 0.0
        %627 = vmatpush.msra.mxu0 0.0
        %628 = vmatpush.msra.mxu0 0.0
        %629 = vmatpush.msra.mxu0 0.0
        %630 = vmatpush.msra.mxu0 0.0
        %631 = vmatpush.msra.mxu0 0.0
        %632 = vmatpush.msra.mxu0 0.0
        %633 = vmatpush.msra.mxu0 0.0
        %634 = vmatpush.msra.mxu0 0.0
        %635 = vmatpush.msra.mxu0 0.0
        %636 = vmatpush.msra.mxu0 0.0
        %637 = vmatpush.msra.mxu0 %v621
        %638 = vmatpush.msra.mxu0 %v620
        %639 = vmatpush.msra.mxu0 %v619
        %640 = vmatpush.msra.mxu0 %v618
        %641 = vmatmul.f32.gmra.mxu0 %v623
        %v642 = vpop.f32.mrf.mxu0
        %v643 = vadd.f32 0.0, %v642
        %644 = vdwg.mxu0
        %v645 = vmul.f32 %v617, %v643
        %646 = vst.msk [vmem:[%s431] sm:$0xff] %vm529, %v645
        %s647 = sand.u32 %s246, 1
        %s648 = scalar_lea.sflag [#allocation7], %s647
        %s649 = sand.u32 %s246, 1
        %s650 = smul.addr %s649, 8
        %s651 = scalar_lea.vmem [#allocation14], %s650
        // Predicated region
        $region81: #{tpu_custom_call.1} parent=55 // pred_check
          %p652 = pneg %p256
        $region82: #{tpu_custom_call.1} parent=55 // pred_check_branch
          %654 = sbr.rel (%p652) target = $region84
        $region83: #{tpu_custom_call.1} parent=55 // pred_region
          %656 = vsyncadd %s648, 0
          %s657 = smul.addr %s32, 2
          %s658 = sadd.s32 %s33, %s657
          %s659 = smul.addr %s658, 8
          %s660 = scalar_lea.hbm %s9, %s659
          %s662 = sshll.u32 %s651, 4
          %s663 = int_to_ptr.vmem [resolvable:$true] %s662
          %s664 = sshll.u32 %s660, 4
          %s665 = int_to_ptr.hbm [resolvable:$true] %s664
          %667 = dma.vmem_to_hbm [thread:$0]  %s663, 128, %s665, %s648
        $region84: #{tpu_custom_call.1} parent=55 // pred_fallthru
          _
      $region56: #{tpu_custom_call.1} parent=5 // pred_fallthru
        _
      %p668 = scmp.le.s32.totalorder 2, %s23
      // Predicated region
      $region85: #{tpu_custom_call.1} parent=5 // pred_check
        %p669 = pneg %p668
      $region86: #{tpu_custom_call.1} parent=5 // pred_check_branch
        %671 = sbr.rel (%p669) target = $region88
      $region87: #{tpu_custom_call.1} parent=5 // pred_region
        %s672 = ssub.s32 %s23, 2
        // Predicated region
        $region89: #{tpu_custom_call.1} parent=87 // pred_check
          %p673 = pneg %p262
        $region90: #{tpu_custom_call.1} parent=87 // pred_check_branch
          %675 = sbr.rel (%p673) target = $region92
        $region91: #{tpu_custom_call.1} parent=87 // pred_region
          %s676 = sand.u32 %s247, 1
          %s677 = scalar_lea.sflag [#allocation7], %s676
          %s678 = sand.u32 %s247, 1
          %s679 = smul.addr %s678, 8
          %s680 = scalar_lea.vmem [#allocation14], %s679
          %682 = dma.done %s677, 128
        $region92: #{tpu_custom_call.1} parent=87 // pred_fallthru
          _
      $region88: #{tpu_custom_call.1} parent=5 // pred_fallthru
        _
    $region6: #{tpu_custom_call.1} parent=1 // loop_footer
      %s27 = sadd.s32 1, %s23
    $region7: #{tpu_custom_call.1} parent=1 // loop_footer_branch
      %22 = sbr.rel target = $region3
    $region8: #{tpu_custom_call.1} parent=1 // loop_exit
      _
    %683 = vsyncpa [#allocation6], 1
    %s684 = scalar_lea.sflag [#allocation6], 1
    %685 = vsyncpa %s684, 1
    %686 = vsyncpa [#allocation9], 1
    %687 = vsyncpa [#allocation12], 1
    %688 = vsyncpa [#allocation7], 1
    %s689 = scalar_lea.sflag [#allocation7], 1
    %690 = vsyncpa %s689, 1

// kernel: tpu_custom_call.1
$region0: #{tpu_custom_call.1}
  #allocation0 [shape = 'u32[]', space=smem, size = 0x4, offset = 0x4, fixed_abs, tag = 'smem constant byte address 0x4 - core index']
  #allocation1 [shape = 'u32[72,128]{1,0:T(1,128)}', space=vmem, size = 0x9000, scoped, tag = 'internal scratch']
  #allocation2 [shape = 'f32[1,32]{1,0:T(1,128)}', space=vmem, size = 0x200, scoped, tag = 'scratch operand']
  #allocation3 [shape = 'f32[1,8,32]{2,1,0:T(8,128)}', space=vmem, size = 0x1000, scoped, tag = 'scratch operand']
  #allocation4 [shape = 'f32[1,8,32]{2,1,0:T(8,128)}', space=vmem, size = 0x1000, scoped, tag = 'scratch operand']
  %s0 = inlined_call_operand.hbm [shape: f32[2,16,32], index: 0, kind: input, shape index: {}]
  %s1 = inlined_call_operand.hbm [shape: f32[1,1,32], index: 1, kind: input, shape index: {}]
  %s2 = inlined_call_operand.vmem [shape: f32[1,1,32], index: 2, kind: input, shape index: {}]
  %s3 = inlined_call_operand.vmem [shape: f32[1,1,32], index: 3, kind: input, shape index: {}]
  %s4 = inlined_call_operand.vmem [shape: f32[1,1,32], index: 4, kind: input, shape index: {}]
  %s5 = inlined_call_operand.vmem [shape: f32[1,32], index: 5, kind: input, shape index: {}]
  %s6 = inlined_call_operand.hbm [shape: f32[32,32], index: 6, kind: input, shape index: {}]
  %s7 = inlined_call_operand.hbm [shape: f32[32,32], index: 7, kind: input, shape index: {}]
  %s8 = inlined_call_operand.hbm [shape: f32[32,32], index: 8, kind: input, shape index: {}]
  %s9 = inlined_call_operand.hbm [shape: f32[2,16,32], index: 9, kind: output, shape index: {}]
  %s10 = sld [smem:[#allocation0]]
  $region93: #{tpu_custom_call.1} parent=0
    _
  %s12 = ssub.s32 1, %s10
  %s13 = scalar_select 0, %s12, %s10
  $region1: #{tpu_custom_call.1} parent=0
    #allocation5 [shape = 'u8[8192]{0}', space=vmem, size = 0x2000, scoped, tag = 'input window, operand 0']
    #allocation6 [shape = 's32[2]{0}', space=sflag, size = 0x8, scoped, tag = 'scoped memory for tpu_custom_call.1']
    #allocation7 [shape = 's32[2]{0}', space=sflag, size = 0x8, scoped, tag = 'scoped memory for tpu_custom_call.1']
    #allocation8 [shape = 'u8[512]{0}', space=vmem, size = 0x400, scoped, tag = 'input window, operand 1, single buffered']
    #allocation9 [shape = 's32[1]{0}', space=sflag, size = 0x4, scoped, tag = 'scoped memory for tpu_custom_call.1']
    #allocation10 [shape = 'u8[16384]{0}', space=vmem, size = 0x4000, scoped, tag = 'input window, operand 6, single buffered']
    #allocation11 [shape = 'u8[16384]{0}', space=vmem, size = 0x4000, scoped, tag = 'input window, operand 7, single buffered']
    #allocation12 [shape = 's32[1]{0}', space=sflag, size = 0x4, scoped, tag = 'scoped memory for tpu_custom_call.1']
    #allocation13 [shape = 'u8[16384]{0}', space=vmem, size = 0x4000, scoped, tag = 'input window, operand 8, single buffered']
    #allocation14 [shape = 'u8[8192]{0}', space=vmem, size = 0x2000, scoped, tag = 'output window, operand 0']
    %14 = vsyncpa [#allocation6], 0
    %s15 = scalar_lea.sflag [#allocation6], 1
    %16 = vsyncpa %s15, 0
    %17 = vsyncpa [#allocation9], 0
    %18 = vsyncpa [#allocation12], 0
    %19 = vsyncpa [#allocation7], 0
    %s20 = scalar_lea.sflag [#allocation7], 1
    %21 = vsyncpa %s20, 0
    loop: start=0, step=1, limit=6
    $region2: #{tpu_custom_call.1} parent=1 // loop_pre_header
      _
    $region3: #{tpu_custom_call.1} parent=1 // loop_header
      %s23 = sphi 0, %s27
      %p24 = scmp.ge.s32.totalorder %s23, 6
      %s30 = sphi 0, %s42
      %s31 = sphi 0, %s38
      %s32 = sphi 0, %s30
      %s33 = sphi 0, %s31
      %s34 = sphi 0, %s32
      %s35 = sphi 0, %s33
      %s47 = sphi 0, %s49
      %s50 = sphi 0, %s47
      %s51 = sphi 0, %s50
      %s67 = sphi 0, %s51
      %s71 = sphi 0, %s71
      %s73 = sphi 0, %s71
      %s74 = sphi 0, %s73
      %s88 = sphi 0, %s74
      %s92 = sphi 0, %s92
      %s94 = sphi 0, %s92
      %s95 = sphi 0, %s94
      %s109 = sphi 0, %s95
      %s113 = sphi 0, %s113
      %s115 = sphi 0, %s113
      %s116 = sphi 0, %s115
      %s130 = sphi 0, %s116
      %s134 = sphi 0, %s134
      %s136 = sphi 0, %s134
      %s137 = sphi 0, %s136
      %s151 = sphi 0, %s137
      %s155 = sphi 0, %s155
      %s157 = sphi 0, %s155
      %s158 = sphi 0, %s157
      %s172 = sphi 0, %s158
      %s176 = sphi 0, %s176
      %s178 = sphi 0, %s176
      %s179 = sphi 0, %s178
      %s193 = sphi 0, %s179
      %s197 = sphi 0, %s197
      %s199 = sphi 0, %s197
      %s200 = sphi 0, %s199
      %s214 = sphi 0, %s200
      %s218 = sphi 0, %s218
      %s220 = sphi 0, %s218
      %s221 = sphi 0, %s220
      %s235 = sphi 0, %s221
      %s243 = sphi 0, %s245
      %s246 = sphi 0, %s243
      %s247 = sphi 0, %s246
      %s263 = sphi 0, %s247
    $region4: #{tpu_custom_call.1} parent=1 // loop_header_branch
      %26 = sbr.rel (%p24) target = $region8
    $region5: #{tpu_custom_call.1} parent=1 // loop_body
      %s28 = ssub.s32 %s23, 1
      %s29 = ssub.s32 %s23, 2
      %s36 = sadd.s32 1, %s31
      %p37 = scmp.ge.s32.totalorder %s36, 2
      %s38 = scalar_select %p37, 0, %s36
      %s39 = sadd.s32 1, %s30
      %s40 = scalar_select %p37, %s39, %s30
      %p41 = scmp.ge.s32.totalorder %s40, 2
      %s42 = scalar_select %p41, 0, %s40
      %s43 = ssub.s32 %s30, %s42
      %s44 = ssub.s32 %s31, %s38
      %s45 = sor.u32 %s43, %s44
      %p46 = scmp.eq.s32.totalorder %s45, 0
      %s48 = sadd.s32 %s47, 1
      %s49 = scalar_select %p46, %s47, %s48
      %p52 = pneg %p46
      %p53 = scmp.eq.s32.totalorder %s23, 3
      %p54 = por %p52, %p53
      %p55 = scmp.ne.s32.totalorder %s47, %s50
      %p56 = scmp.eq.s32.totalorder %s23, 0
      %p57 = por %p55, %p56
      %p58 = scmp.ne.s32.totalorder %s47, %s50
      %p59 = scmp.eq.s32.totalorder %s28, 3
      %p60 = por %p58, %p59
      %p61 = scmp.ne.s32.totalorder %s50, %s51
      %p62 = scmp.eq.s32.totalorder %s28, 0
      %p63 = por %p61, %p62
      %p64 = scmp.ne.s32.totalorder %s50, %s51
      %p65 = scmp.eq.s32.totalorder %s29, 3
      %p66 = por %p64, %p65
      %p68 = scmp.ne.s32.totalorder %s51, %s67
      %p69 = scmp.eq.s32.totalorder %s29, 0
      %p70 = por %p68, %p69
      %s72 = sadd.s32 %s71, 1
      %p75 = scmp.eq.s32.totalorder %s23, 3
      %p76 = scmp.ne.s32.totalorder %s71, %s73
      %p77 = scmp.eq.s32.totalorder %s23, 0
      %p78 = por %p76, %p77
      %p79 = scmp.ne.s32.totalorder %s71, %s73
      %p80 = scmp.eq.s32.totalorder %s28, 3
      %p81 = por %p79, %p80
      %p82 = scmp.ne.s32.totalorder %s73, %s74
      %p83 = scmp.eq.s32.totalorder %s28, 0
      %p84 = por %p82, %p83
      %p85 = scmp.ne.s32.totalorder %s73, %s74
      %p86 = scmp.eq.s32.totalorder %s29, 3
      %p87 = por %p85, %p86
      %p89 = scmp.ne.s32.totalorder %s74, %s88
      %p90 = scmp.eq.s32.totalorder %s29, 0
      %p91 = por %p89, %p90
      %s93 = sadd.s32 %s92, 1
      %p96 = scmp.eq.s32.totalorder %s23, 3
      %p97 = scmp.ne.s32.totalorder %s92, %s94
      %p98 = scmp.eq.s32.totalorder %s23, 0
      %p99 = por %p97, %p98
      %p100 = scmp.ne.s32.totalorder %s92, %s94
      %p101 = scmp.eq.s32.totalorder %s28, 3
      %p102 = por %p100, %p101
      %p103 = scmp.ne.s32.totalorder %s94, %s95
      %p104 = scmp.eq.s32.totalorder %s28, 0
      %p105 = por %p103, %p104
      %p106 = scmp.ne.s32.totalorder %s94, %s95
      %p107 = scmp.eq.s32.totalorder %s29, 3
      %p108 = por %p106, %p107
      %p110 = scmp.ne.s32.totalorder %s95, %s109
      %p111 = scmp.eq.s32.totalorder %s29, 0
      %p112 = por %p110, %p111
      %s114 = sadd.s32 %s113, 1
      %p117 = scmp.eq.s32.totalorder %s23, 3
      %p118 = scmp.ne.s32.totalorder %s113, %s115
      %p119 = scmp.eq.s32.totalorder %s23, 0
      %p120 = por %p118, %p119
      %p121 = scmp.ne.s32.totalorder %s113, %s115
      %p122 = scmp.eq.s32.totalorder %s28, 3
      %p123 = por %p121, %p122
      %p124 = scmp.ne.s32.totalorder %s115, %s116
      %p125 = scmp.eq.s32.totalorder %s28, 0
      %p126 = por %p124, %p125
      %p127 = scmp.ne.s32.totalorder %s115, %s116
      %p128 = scmp.eq.s32.totalorder %s29, 3
      %p129 = por %p127, %p128
      %p131 = scmp.ne.s32.totalorder %s116, %s130
      %p132 = scmp.eq.s32.totalorder %s29, 0
      %p133 = por %p131, %p132
      %s135 = sadd.s32 %s134, 1
      %p138 = scmp.eq.s32.totalorder %s23, 3
      %p139 = scmp.ne.s32.totalorder %s134, %s136
      %p140 = scmp.eq.s32.totalorder %s23, 0
      %p141 = por %p139, %p140
      %p142 = scmp.ne.s32.totalorder %s134, %s136
      %p143 = scmp.eq.s32.totalorder %s28, 3
      %p144 = por %p142, %p143
      %p145 = scmp.ne.s32.totalorder %s136, %s137
      %p146 = scmp.eq.s32.totalorder %s28, 0
      %p147 = por %p145, %p146
      %p148 = scmp.ne.s32.totalorder %s136, %s137
      %p149 = scmp.eq.s32.totalorder %s29, 3
      %p150 = por %p148, %p149
      %p152 = scmp.ne.s32.totalorder %s137, %s151
      %p153 = scmp.eq.s32.totalorder %s29, 0
      %p154 = por %p152, %p153
      %s156 = sadd.s32 %s155, 1
      %p159 = scmp.eq.s32.totalorder %s23, 3
      %p160 = scmp.ne.s32.totalorder %s155, %s157
      %p161 = scmp.eq.s32.totalorder %s23, 0
      %p162 = por %p160, %p161
      %p163 = scmp.ne.s32.totalorder %s155, %s157
      %p164 = scmp.eq.s32.totalorder %s28, 3
      %p165 = por %p163, %p164
      %p166 = scmp.ne.s32.totalorder %s157, %s158
      %p167 = scmp.eq.s32.totalorder %s28, 0
      %p168 = por %p166, %p167
      %p169 = scmp.ne.s32.totalorder %s157, %s158
      %p170 = scmp.eq.s32.totalorder %s29, 3
      %p171 = por %p169, %p170
      %p173 = scmp.ne.s32.totalorder %s158, %s172
      %p174 = scmp.eq.s32.totalorder %s29, 0
      %p175 = por %p173, %p174
      %s177 = sadd.s32 %s176, 1
      %p180 = scmp.eq.s32.totalorder %s23, 3
      %p181 = scmp.ne.s32.totalorder %s176, %s178
      %p182 = scmp.eq.s32.totalorder %s23, 0
      %p183 = por %p181, %p182
      %p184 = scmp.ne.s32.totalorder %s176, %s178
      %p185 = scmp.eq.s32.totalorder %s28, 3
      %p186 = por %p184, %p185
      %p187 = scmp.ne.s32.totalorder %s178, %s179
      %p188 = scmp.eq.s32.totalorder %s28, 0
      %p189 = por %p187, %p188
      %p190 = scmp.ne.s32.totalorder %s178, %s179
      %p191 = scmp.eq.s32.totalorder %s29, 3
      %p192 = por %p190, %p191
      %p194 = scmp.ne.s32.totalorder %s179, %s193
      %p195 = scmp.eq.s32.totalorder %s29, 0
      %p196 = por %p194, %p195
      %s198 = sadd.s32 %s197, 1
      %p201 = scmp.eq.s32.totalorder %s23, 3
      %p202 = scmp.ne.s32.totalorder %s197, %s199
      %p203 = scmp.eq.s32.totalorder %s23, 0
      %p204 = por %p202, %p203
      %p205 = scmp.ne.s32.totalorder %s197, %s199
      %p206 = scmp.eq.s32.totalorder %s28, 3
      %p207 = por %p205, %p206
      %p208 = scmp.ne.s32.totalorder %s199, %s200
      %p209 = scmp.eq.s32.totalorder %s28, 0
      %p210 = por %p208, %p209
      %p211 = scmp.ne.s32.totalorder %s199, %s200
      %p212 = scmp.eq.s32.totalorder %s29, 3
      %p213 = por %p211, %p212
      %p215 = scmp.ne.s32.totalorder %s200, %s214
      %p216 = scmp.eq.s32.totalorder %s29, 0
      %p217 = por %p215, %p216
      %s219 = sadd.s32 %s218, 1
      %p222 = scmp.eq.s32.totalorder %s23, 3
      %p223 = scmp.ne.s32.totalorder %s218, %s220
      %p224 = scmp.eq.s32.totalorder %s23, 0
      %p225 = por %p223, %p224
      %p226 = scmp.ne.s32.totalorder %s218, %s220
      %p227 = scmp.eq.s32.totalorder %s28, 3
      %p228 = por %p226, %p227
      %p229 = scmp.ne.s32.totalorder %s220, %s221
      %p230 = scmp.eq.s32.totalorder %s28, 0
      %p231 = por %p229, %p230
      %p232 = scmp.ne.s32.totalorder %s220, %s221
      %p233 = scmp.eq.s32.totalorder %s29, 3
      %p234 = por %p232, %p233
      %p236 = scmp.ne.s32.totalorder %s221, %s235
      %p237 = scmp.eq.s32.totalorder %s29, 0
      %p238 = por %p236, %p237
      %s239 = ssub.s32 %s30, %s42
      %s240 = ssub.s32 %s31, %s38
      %s241 = sor.u32 %s239, %s240
      %p242 = scmp.eq.s32.totalorder %s241, 0
      %s244 = sadd.s32 %s243, 1
      %s245 = scalar_select %p242, %s243, %s244
      %p248 = pneg %p242
      %p249 = scmp.eq.s32.totalorder %s23, 3
      %p250 = por %p248, %p249
      %p251 = scmp.ne.s32.totalorder %s243, %s246
      %p252 = scmp.eq.s32.totalorder %s23, 0
      %p253 = por %p251, %p252
      %p254 = scmp.ne.s32.totalorder %s243, %s246
      %p255 = scmp.eq.s32.totalorder %s28, 3
      %p256 = por %p254, %p255
      %p257 = scmp.ne.s32.totalorder %s246, %s247
      %p258 = scmp.eq.s32.totalorder %s28, 0
      %p259 = por %p257, %p258
      %p260 = scmp.ne.s32.totalorder %s246, %s247
      %p261 = scmp.eq.s32.totalorder %s29, 3
      %p262 = por %p260, %p261
      %p264 = scmp.ne.s32.totalorder %s247, %s263
      %p265 = scmp.eq.s32.totalorder %s29, 0
      %p266 = por %p264, %p265
      %p267 = scmp.le.s32.totalorder 1, %s23
      %p268 = scmp.lt.s32.totalorder %s23, 5
      %p269 = pnand %p267, %p268
      %p270 = pneg %p269
      // Predicated region
      $region9: #{tpu_custom_call.1} parent=5 // pred_check
        _
      $region10: #{tpu_custom_call.1} parent=5 // pred_check_branch
        %272 = sbr.rel (%p269) target = $region12
      $region11: #{tpu_custom_call.1} parent=5 // pred_region
        %s273 = ssub.s32 %s23, 1
        // Predicated region
        $region13: #{tpu_custom_call.1} parent=11 // pred_check
          %p274 = pneg %p84
        $region14: #{tpu_custom_call.1} parent=11 // pred_check_branch
          %276 = sbr.rel (%p274) target = $region16
        $region15: #{tpu_custom_call.1} parent=11 // pred_region
          %278 = vsyncadd [#allocation9], 0
          %s280 = sshll.u32 %s1, 4
          %s281 = int_to_ptr.hbm [resolvable:$true] %s280
          %s282 = sshll.u32 [#allocation8], 4
          %s283 = int_to_ptr.vmem [resolvable:$true] %s282
          %285 = dma.hbm_to_vmem [thread:$0]  %s281, 16, %s283, [#allocation9]
        $region16: #{tpu_custom_call.1} parent=11 // pred_fallthru
          _
        // Predicated region
        $region17: #{tpu_custom_call.1} parent=11 // pred_check
          %p286 = pneg %p105
        $region18: #{tpu_custom_call.1} parent=11 // pred_check_branch
          %288 = sbr.rel (%p286) target = $region20
        $region19: #{tpu_custom_call.1} parent=11 // pred_region
          _
        $region20: #{tpu_custom_call.1} parent=11 // pred_fallthru
          _
        // Predicated region
        $region21: #{tpu_custom_call.1} parent=11 // pred_check
          %p289 = pneg %p126
        $region22: #{tpu_custom_call.1} parent=11 // pred_check_branch
          %291 = sbr.rel (%p289) target = $region24
        $region23: #{tpu_custom_call.1} parent=11 // pred_region
          _
        $region24: #{tpu_custom_call.1} parent=11 // pred_fallthru
          _
        // Predicated region
        $region25: #{tpu_custom_call.1} parent=11 // pred_check
          %p292 = pneg %p147
        $region26: #{tpu_custom_call.1} parent=11 // pred_check_branch
          %294 = sbr.rel (%p292) target = $region28
        $region27: #{tpu_custom_call.1} parent=11 // pred_region
          _
        $region28: #{tpu_custom_call.1} parent=11 // pred_fallthru
          _
        // Predicated region
        $region29: #{tpu_custom_call.1} parent=11 // pred_check
          %p295 = pneg %p168
        $region30: #{tpu_custom_call.1} parent=11 // pred_check_branch
          %297 = sbr.rel (%p295) target = $region32
        $region31: #{tpu_custom_call.1} parent=11 // pred_region
          _
        $region32: #{tpu_custom_call.1} parent=11 // pred_fallthru
          _
        // Predicated region
        $region33: #{tpu_custom_call.1} parent=11 // pred_check
          %p298 = pneg %p189
        $region34: #{tpu_custom_call.1} parent=11 // pred_check_branch
          %300 = sbr.rel (%p298) target = $region36
        $region35: #{tpu_custom_call.1} parent=11 // pred_region
          %302 = vsyncadd [#allocation9], 0
          %s303 = sshll.u32 %s6, 4
          %s304 = int_to_ptr.hbm [resolvable:$true] %s303
          %s305 = sshll.u32 [#allocation10], 4
          %s306 = int_to_ptr.vmem [resolvable:$true] %s305
          %311 = dma.hbm_to_vmem [thread:$0]  %s304, 512, %s306, [#allocation9], 128, 128, 8
        $region36: #{tpu_custom_call.1} parent=11 // pred_fallthru
          _
        // Predicated region
        $region37: #{tpu_custom_call.1} parent=11 // pred_check
          %p312 = pneg %p210
        $region38: #{tpu_custom_call.1} parent=11 // pred_check_branch
          %314 = sbr.rel (%p312) target = $region40
        $region39: #{tpu_custom_call.1} parent=11 // pred_region
          %316 = vsyncadd [#allocation12], 0
          %s317 = sshll.u32 %s7, 4
          %s318 = int_to_ptr.hbm [resolvable:$true] %s317
          %s319 = sshll.u32 [#allocation11], 4
          %s320 = int_to_ptr.vmem [resolvable:$true] %s319
          %325 = dma.hbm_to_vmem [thread:$0]  %s318, 512, %s320, [#allocation12], 128, 128, 8
        $region40: #{tpu_custom_call.1} parent=11 // pred_fallthru
          _
        // Predicated region
        $region41: #{tpu_custom_call.1} parent=11 // pred_check
          %p326 = pneg %p231
        $region42: #{tpu_custom_call.1} parent=11 // pred_check_branch
          %328 = sbr.rel (%p326) target = $region44
        $region43: #{tpu_custom_call.1} parent=11 // pred_region
          %330 = vsyncadd [#allocation12], 0
          %s331 = sshll.u32 %s8, 4
          %s332 = int_to_ptr.hbm [resolvable:$true] %s331
          %s333 = sshll.u32 [#allocation13], 4
          %s334 = int_to_ptr.vmem [resolvable:$true] %s333
          %339 = dma.hbm_to_vmem [thread:$0]  %s332, 512, %s334, [#allocation12], 128, 128, 8
        $region44: #{tpu_custom_call.1} parent=11 // pred_fallthru
          _
      $region12: #{tpu_custom_call.1} parent=5 // pred_fallthru
        _
      %p340 = scmp.lt.s32.totalorder %s23, 4
      // Predicated region
      $region45: #{tpu_custom_call.1} parent=5 // pred_check
        %p341 = pneg %p340
      $region46: #{tpu_custom_call.1} parent=5 // pred_check_branch
        %343 = sbr.rel (%p341) target = $region48
      $region47: #{tpu_custom_call.1} parent=5 // pred_region
        // Predicated region
        $region49: #{tpu_custom_call.1} parent=47 // pred_check
          %p344 = pneg %p57
        $region50: #{tpu_custom_call.1} parent=47 // pred_check_branch
          %346 = sbr.rel (%p344) target = $region52
        $region51: #{tpu_custom_call.1} parent=47 // pred_region
          %s347 = sand.u32 %s47, 1
          %s348 = scalar_lea.sflag [#allocation6], %s347
          %s349 = sand.u32 %s47, 1
          %s350 = smul.addr %s349, 8
          %s351 = scalar_lea.vmem [#allocation5], %s350
          %353 = vsyncadd %s348, 0
          %s354 = smul.addr %s30, 2
          %s355 = sadd.s32 %s31, %s354
          %s356 = smul.addr %s355, 8
          %s357 = scalar_lea.hbm %s0, %s356
          %s359 = sshll.u32 %s357, 4
          %s360 = int_to_ptr.hbm [resolvable:$true] %s359
          %s361 = sshll.u32 %s351, 4
          %s362 = int_to_ptr.vmem [resolvable:$true] %s361
          %364 = dma.hbm_to_vmem [thread:$0]  %s360, 128, %s362, %s348
        $region52: #{tpu_custom_call.1} parent=47 // pred_fallthru
          _
      $region48: #{tpu_custom_call.1} parent=5 // pred_fallthru
        _
      %p365 = scmp.le.s32.totalorder 1, %s23
      %p366 = scmp.lt.s32.totalorder %s23, 5
      %p367 = pnand %p365, %p366
      %p368 = pneg %p367
      // Predicated region
      $region53: #{tpu_custom_call.1} parent=5 // pred_check
        _
      $region54: #{tpu_custom_call.1} parent=5 // pred_check_branch
        %370 = sbr.rel (%p367) target = $region56
      $region55: #{tpu_custom_call.1} parent=5 // pred_region
        %s371 = ssub.s32 %s23, 1
        %s372 = sand.u32 %s50, 1
        %s373 = scalar_lea.sflag [#allocation6], %s372
        %s374 = sand.u32 %s50, 1
        %s375 = smul.addr %s374, 8
        %s376 = scalar_lea.vmem [#allocation5], %s375
        // Predicated region
        $region57: #{tpu_custom_call.1} parent=55 // pred_check
          %p377 = pneg %p63
        $region58: #{tpu_custom_call.1} parent=55 // pred_check_branch
          %379 = sbr.rel (%p377) target = $region60
        $region59: #{tpu_custom_call.1} parent=55 // pred_region
          %381 = dma.done %s373, 128
        $region60: #{tpu_custom_call.1} parent=55 // pred_fallthru
          _
        // Predicated region
        $region61: #{tpu_custom_call.1} parent=55 // pred_check
          %p382 = pneg %p84
        $region62: #{tpu_custom_call.1} parent=55 // pred_check_branch
          %384 = sbr.rel (%p382) target = $region64
        $region63: #{tpu_custom_call.1} parent=55 // pred_region
          %386 = dma.done [#allocation9], 16
        $region64: #{tpu_custom_call.1} parent=55 // pred_fallthru
          _
        // Predicated region
        $region65: #{tpu_custom_call.1} parent=55 // pred_check
          %p387 = pneg %p189
        $region66: #{tpu_custom_call.1} parent=55 // pred_check_branch
          %389 = sbr.rel (%p387) target = $region68
        $region67: #{tpu_custom_call.1} parent=55 // pred_region
          %391 = dma.done [#allocation9], 512
        $region68: #{tpu_custom_call.1} parent=55 // pred_fallthru
          _
        // Predicated region
        $region69: #{tpu_custom_call.1} parent=55 // pred_check
          %p392 = pneg %p210
        $region70: #{tpu_custom_call.1} parent=55 // pred_check_branch
          %394 = sbr.rel (%p392) target = $region72
        $region71: #{tpu_custom_call.1} parent=55 // pred_region
          %396 = dma.done [#allocation12], 512
        $region72: #{tpu_custom_call.1} parent=55 // pred_fallthru
          _
        // Predicated region
        $region73: #{tpu_custom_call.1} parent=55 // pred_check
          %p397 = pneg %p231
        $region74: #{tpu_custom_call.1} parent=55 // pred_check_branch
          %399 = sbr.rel (%p397) target = $region76
        $region75: #{tpu_custom_call.1} parent=55 // pred_region
          %401 = dma.done [#allocation12], 512
        $region76: #{tpu_custom_call.1} parent=55 // pred_fallthru
          _
        %s402 = sand.u32 %s50, 1
        %s403 = scalar_lea.sflag [#allocation6], %s402
        %s404 = sand.u32 %s50, 1
        %s405 = smul.addr %s404, 8
        %s406 = scalar_lea.vmem [#allocation5], %s405
        %p407 = pneg %p63
        %p408 = pneg %p60
        %p409 = pneg %p84
        %p410 = pneg %p81
        %p411 = pneg %p105
        %p412 = pneg %p102
        %p413 = pneg %p126
        %p414 = pneg %p123
        %p415 = pneg %p147
        %p416 = pneg %p144
        %p417 = pneg %p168
        %p418 = pneg %p165
        %p419 = pneg %p189
        %p420 = pneg %p186
        %p421 = pneg %p210
        %p422 = pneg %p207
        %p423 = pneg %p231
        %p424 = pneg %p228
        %p425 = pneg %p259
        %p426 = pneg %p256
        %s427 = sand.u32 %s246, 1
        %s428 = scalar_lea.sflag [#allocation7], %s427
        %s429 = sand.u32 %s246, 1
        %s430 = smul.addr %s429, 8
        %s431 = scalar_lea.vmem [#allocation14], %s430
        %p432 = scmp.eq.s32.totalorder %s33, 0
        // Predicated region
        $region77: #{tpu_custom_call.1} parent=55 // pred_check
          %p433 = pneg %p432
        $region78: #{tpu_custom_call.1} parent=55 // pred_check_branch
          %435 = sbr.rel (%p433) target = $region80
        $region79: #{tpu_custom_call.1} parent=55 // pred_region
          %vm436 = vcmask 253952
          %437 = vst.msk [vmem:[#allocation2] sm:$0x1] %vm436, 0.0
        $region80: #{tpu_custom_call.1} parent=55 // pred_fallthru
          _
        %v438 = vld [vmem:[%s5] sm:$0x1]
        %v439 = vld [vmem:[#allocation8] sm:$0x1]
        %v440 = vld [vmem:[%s2] sm:$0x1]
        %v441 = vld [vmem:[%s3] sm:$0x1]
        %v442 = vld [vmem:[%s4] sm:$0x1]
        %v443 = vld [vmem:[#allocation2] sm:$0x1]
        %v444 = vld [vmem:[%s376] sm:$0xff]
        %v445 = vmul.f32 %v443, %v438
        %v446 = vadd.f32 %v444, %v445
        %v447 = vmul.f32 %v446, %v438
        %v449 = vrot.slane %v447, 7
        %v451 = vadd.f32 %v444, %v449
        %v453 = vperm.slane %v438, 0
        %v455 = vmul.f32 %v451, %v453
        %v457 = vrot.slane %v455, 7
        %v459 = vadd.f32 %v444, %v457
        %v460 = vmul.f32 %v459, %v453
        %v462 = vrot.slane %v460, 7
        %v464 = vadd.f32 %v444, %v462
        %v465 = vmul.f32 %v464, %v453
        %v467 = vrot.slane %v465, 7
        %v469 = vadd.f32 %v444, %v467
        %v470 = vmul.f32 %v469, %v453
        %v472 = vrot.slane %v470, 7
        %v474 = vadd.f32 %v444, %v472
        %v475 = vmul.f32 %v474, %v453
        %v477 = vrot.slane %v475, 7
        %v479 = vadd.f32 %v444, %v477
        %v480 = vmul.f32 %v479, %v453
        %v482 = vrot.slane %v480, 7
        %v484 = vadd.f32 %v444, %v482
        %v486 = vrot.slane %v446, 7
        %v489 = vrot.slane %v451, 7
        %v492 = vrot.slane %v459, 7
        %v495 = vrot.slane %v464, 7
        %v498 = vrot.slane %v469, 7
        %v501 = vrot.slane %v474, 7
        %v504 = vrot.slane %v479, 7
        %vm506 = vcmask 1040384
        %v507 = vsel %vm506, %v443, %v486
        %vm508 = vcmask 1041408
        %v509 = vsel %vm508, %v507, %v489
        %vm510 = vcmask 1042432
        %v511 = vsel %vm510, %v509, %v492
        %vm512 = vcmask 1043456
        %v513 = vsel %vm512, %v511, %v495
        %vm514 = vcmask 1044480
        %v515 = vsel %vm514, %v513, %v498
        %vm516 = vcmask 1045504
        %v517 = vsel %vm516, %v515, %v501
        %vm518 = vcmask 1046528
        %v519 = vsel %vm518, %v517, %v504
        %v521 = vperm.slane %v439, 0
        %v523 = vmul.f32 %v444, %v521
        %v525 = vperm.slane %v440, 0
        %v527 = vmul.f32 %v519, %v525
        %v528 = vadd.f32 %v523, %v527
        %vm529 = vcmask 261120
        %530 = vst.msk [vmem:[#allocation3] sm:$0xff] %vm529, %v528
        %v532 = vperm.slane %v441, 0
        %v534 = vmul.f32 %v444, %v532
        %v536 = vperm.slane %v442, 0
        %v538 = vmul.f32 %v519, %v536
        %v539 = vadd.f32 %v534, %v538
        %540 = vst.msk [vmem:[#allocation4] sm:$0xff] %vm529, %v539
        %vm541 = vcmask 261127
        %542 = vst.msk [vmem:[#allocation2 - $0x7] sm:$0x80] %vm541, %v484
        %v543 = vld [vmem:[#allocation3] sm:$0xff]
        %v544 = vld [vmem:[#allocation4] sm:$0xff]
        %v545 = vld [vmem:[#allocation10] sm:$0xff]
        %v546 = vld [vmem:[#allocation10 + $0x8] sm:$0xff]
        %v547 = vld [vmem:[#allocation10 + $0x10] sm:$0xff]
        %v548 = vld [vmem:[#allocation10 + $0x18] sm:$0xff]
        %v550 = vsel %vm529, %v543, 0
        %552 = vmatpush.msra.mxu0 0.0
        %553 = vmatpush.msra.mxu0 0.0
        %554 = vmatpush.msra.mxu0 0.0
        %555 = vmatpush.msra.mxu0 0.0
        %556 = vmatpush.msra.mxu0 0.0
        %557 = vmatpush.msra.mxu0 0.0
        %558 = vmatpush.msra.mxu0 0.0
        %559 = vmatpush.msra.mxu0 0.0
        %560 = vmatpush.msra.mxu0 0.0
        %561 = vmatpush.msra.mxu0 0.0
        %562 = vmatpush.msra.mxu0 0.0
        %563 = vmatpush.msra.mxu0 0.0
        %564 = vmatpush.msra.mxu0 %v548
        %565 = vmatpush.msra.mxu0 %v547
        %566 = vmatpush.msra.mxu0 %v546
        %567 = vmatpush.msra.mxu0 %v545
        %568 = vmatmul.f32.gmra.mxu0 %v550
        %v569 = vpop.f32.mrf.mxu0
        %v570 = vadd.f32 0.0, %v569
        %571 = vdwg.mxu0
        %v572 = vld [vmem:[#allocation11] sm:$0xff]
        %v573 = vld [vmem:[#allocation11 + $0x8] sm:$0xff]
        %v574 = vld [vmem:[#allocation11 + $0x10] sm:$0xff]
        %v575 = vld [vmem:[#allocation11 + $0x18] sm:$0xff]
        %v577 = vsel %vm529, %v544, 0
        %579 = vmatpush.msra.mxu0 0.0
        %580 = vmatpush.msra.mxu0 0.0
        %581 = vmatpush.msra.mxu0 0.0
        %582 = vmatpush.msra.mxu0 0.0
        %583 = vmatpush.msra.mxu0 0.0
        %584 = vmatpush.msra.mxu0 0.0
        %585 = vmatpush.msra.mxu0 0.0
        %586 = vmatpush.msra.mxu0 0.0
        %587 = vmatpush.msra.mxu0 0.0
        %588 = vmatpush.msra.mxu0 0.0
        %589 = vmatpush.msra.mxu0 0.0
        %590 = vmatpush.msra.mxu0 0.0
        %591 = vmatpush.msra.mxu0 %v575
        %592 = vmatpush.msra.mxu0 %v574
        %593 = vmatpush.msra.mxu0 %v573
        %594 = vmatpush.msra.mxu0 %v572
        %595 = vmatmul.f32.gmra.mxu0 %v577
        %v596 = vpop.f32.mrf.mxu0
        %v597 = vadd.f32 0.0, %v596
        %598 = vdwg.mxu0
        %v599 = vxor.u32 %v597, 2147483648
        %v600 = vmul.f32 %v599, 1.442695
        %v601 = vpow.pop %v600
        %v602 = vadd.f32 %v601, 1.0
        %v603 = vrcp.pop %v602
        %v604 = vmul.f32 %v602, %v603
        %v605 = vsub.f32 1.0, %v604
        %v606 = vmul.f32 %v603, %v605
        %v607 = vadd.f32 %v603, %v606
        %vm608 = vweird.f32 %v602
        %vm609 = vweird.f32 %v603
        %vm610 = vmor %vm608, %vm609
        %v611 = vsel %vm610, %v603, %v607
        %v612 = vand.u32 2147483647, %v602
        %vm613 = vcmp.eq.f32.partialorder %v612, 8.507059e+37
        %v614 = vand.u32 %v602, 2147483648
        %v615 = vor.u32 1.1754944e-38, %v614
        %v616 = vsel %vm613, %v615, %v611
        %v617 = vmul.f32 1.0, %v616
        %v618 = vld [vmem:[#allocation13] sm:$0xff]
        %v619 = vld [vmem:[#allocation13 + $0x8] sm:$0xff]
        %v620 = vld [vmem:[#allocation13 + $0x10] sm:$0xff]
        %v621 = vld [vmem:[#allocation13 + $0x18] sm:$0xff]
        %v623 = vsel %vm529, %v570, 0
        %625 = vmatpush.msra.mxu0 0.0
        %626 = vmatpush.msra.mxu0 0.0
        %627 = vmatpush.msra.mxu0 0.0
        %628 = vmatpush.msra.mxu0 0.0
        %629 = vmatpush.msra.mxu0 0.0
        %630 = vmatpush.msra.mxu0 0.0
        %631 = vmatpush.msra.mxu0 0.0
        %632 = vmatpush.msra.mxu0 0.0
        %633 = vmatpush.msra.mxu0 0.0
        %634 = vmatpush.msra.mxu0 0.0
        %635 = vmatpush.msra.mxu0 0.0
        %636 = vmatpush.msra.mxu0 0.0
        %637 = vmatpush.msra.mxu0 %v621
        %638 = vmatpush.msra.mxu0 %v620
        %639 = vmatpush.msra.mxu0 %v619
        %640 = vmatpush.msra.mxu0 %v618
        %641 = vmatmul.f32.gmra.mxu0 %v623
        %v642 = vpop.f32.mrf.mxu0
        %v643 = vadd.f32 0.0, %v642
        %644 = vdwg.mxu0
        %v645 = vmul.f32 %v617, %v643
        %646 = vst.msk [vmem:[%s431] sm:$0xff] %vm529, %v645
        %s647 = sand.u32 %s246, 1
        %s648 = scalar_lea.sflag [#allocation7], %s647
        %s649 = sand.u32 %s246, 1
        %s650 = smul.addr %s649, 8
        %s651 = scalar_lea.vmem [#allocation14], %s650
        // Predicated region
        $region81: #{tpu_custom_call.1} parent=55 // pred_check
          %p652 = pneg %p256
        $region82: #{tpu_custom_call.1} parent=55 // pred_check_branch
          %654 = sbr.rel (%p652) target = $region84
        $region83: #{tpu_custom_call.1} parent=55 // pred_region
          %656 = vsyncadd %s648, 0
          %s657 = smul.addr %s32, 2
          %s658 = sadd.s32 %s33, %s657
          %s659 = smul.addr %s658, 8
          %s660 = scalar_lea.hbm %s9, %s659
          %s662 = sshll.u32 %s651, 4
          %s663 = int_to_ptr.vmem [resolvable:$true] %s662
          %s664 = sshll.u32 %s660, 4
          %s665 = int_to_ptr.hbm [resolvable:$true] %s664
          %667 = dma.vmem_to_hbm [thread:$0]  %s663, 128, %s665, %s648
        $region84: #{tpu_custom_call.1} parent=55 // pred_fallthru
          _
      $region56: #{tpu_custom_call.1} parent=5 // pred_fallthru
        _
      %p668 = scmp.le.s32.totalorder 2, %s23
      // Predicated region
      $region85: #{tpu_custom_call.1} parent=5 // pred_check
        %p669 = pneg %p668
      $region86: #{tpu_custom_call.1} parent=5 // pred_check_branch
        %671 = sbr.rel (%p669) target = $region88
      $region87: #{tpu_custom_call.1} parent=5 // pred_region
        %s672 = ssub.s32 %s23, 2
        // Predicated region
        $region89: #{tpu_custom_call.1} parent=87 // pred_check
          %p673 = pneg %p262
        $region90: #{tpu_custom_call.1} parent=87 // pred_check_branch
          %675 = sbr.rel (%p673) target = $region92
        $region91: #{tpu_custom_call.1} parent=87 // pred_region
          %s676 = sand.u32 %s247, 1
          %s677 = scalar_lea.sflag [#allocation7], %s676
          %s678 = sand.u32 %s247, 1
          %s679 = smul.addr %s678, 8
          %s680 = scalar_lea.vmem [#allocation14], %s679
          %682 = dma.done %s677, 128
        $region92: #{tpu_custom_call.1} parent=87 // pred_fallthru
          _
      $region88: #{tpu_custom_call.1} parent=5 // pred_fallthru
        _
    $region6: #{tpu_custom_call.1} parent=1 // loop_footer
      %s27 = sadd.s32 1, %s23
    $region7: #{tpu_custom_call.1} parent=1 // loop_footer_branch
      %22 = sbr.rel target = $region3
    $region8: #{tpu_custom_call.1} parent=1 // loop_exit
      _
    %683 = vsyncpa [#allocation6], 1
    %s684 = scalar_lea.sflag [#allocation6], 1
    %685 = vsyncpa %s684, 1
    %686 = vsyncpa [#allocation9], 1
    %687 = vsyncpa [#allocation12], 1
    %688 = vsyncpa [#allocation7], 1
    %s689 = scalar_lea.sflag [#allocation7], 1
    %690 = vsyncpa %s689, 1

</llo_original>
